<compile_context>
chip_gen: v7x
topology: tpu7x:2x2x1
jax: 0.10.0
libtpu: 0.0.40
codegen_flags: <defaults>
</compile_context>

<pallas_src>
import functools
import math

import jax
import jax.numpy as jnp
from jax import lax
from jax.experimental import pallas as pl
from jax.experimental.pallas import tpu as pltpu


# ---------------------------------------------------------------------------
# Flash-style fused MHA kernel.  Grid = (batch, q-tile, kv-tile).
# ---------------------------------------------------------------------------
def _mha_flash_kernel(q_ref, k_ref, v_ref,
                      wq_ref, bq_ref, wk_ref, bk_ref, wv_ref, bv_ref,
                      wo_ref, bo_ref, o_ref,
                      q_scr, m_scr, l_scr, acc_scr, *, h):
    ki = pl.program_id(2)
    nk = pl.num_programs(2)
    tq, hidden = q_scr.shape
    d_k = hidden // h
    scale = 1.0 / math.sqrt(d_k)

    @pl.when(ki == 0)
    def _init():
        # Project + scale the Q tile once per (batch, q-tile); cache as bf16.
        xq = q_ref[...].astype(jnp.bfloat16)
        qp = jnp.dot(xq, wq_ref[...], preferred_element_type=jnp.float32)
        q_scr[...] = ((qp + bq_ref[...]) * scale).astype(jnp.bfloat16)
        m_scr[...] = jnp.full_like(m_scr, -jnp.inf)
        l_scr[...] = jnp.zeros_like(l_scr)
        acc_scr[...] = jnp.zeros_like(acc_scr)

    # Project the current K/V tile (bf16 MXU, f32 accumulate, bf16 residency).
    xk = k_ref[...].astype(jnp.bfloat16)
    xv = v_ref[...].astype(jnp.bfloat16)
    kp = (jnp.dot(xk, wk_ref[...], preferred_element_type=jnp.float32)
          + bk_ref[...]).astype(jnp.bfloat16)                      # [tk, hidden]
    vp = (jnp.dot(xv, wv_ref[...], preferred_element_type=jnp.float32)
          + bv_ref[...]).astype(jnp.bfloat16)                      # [tk, hidden]

    # Per-head online softmax; h is small and static, so this unrolls at trace
    # time.  Head slices are static lane offsets into the hidden axis.
    for head in range(h):
        lo = head * d_k
        qh = q_scr[:, lo:lo + d_k]                                 # bf16 [tq, d_k]
        kh = kp[:, lo:lo + d_k]                                    # bf16 [tk, d_k]
        vh = vp[:, lo:lo + d_k]

        # scores = qh @ kh^T without materializing a transpose (contract last dims).
        s = lax.dot_general(qh, kh, (((1,), (1,)), ((), ())),
                            preferred_element_type=jnp.float32)    # f32 [tq, tk]

        m_prev = m_scr[head]                                       # f32 [tq, 1]
        m_new = jnp.maximum(m_prev, jnp.max(s, axis=-1, keepdims=True))
        alpha = jnp.exp(m_prev - m_new)
        p = jnp.exp(s - m_new)
        l_scr[head] = alpha * l_scr[head] + jnp.sum(p, axis=-1, keepdims=True)
        acc_scr[:, lo:lo + d_k] = (
            alpha * acc_scr[:, lo:lo + d_k]
            + jnp.dot(p.astype(jnp.bfloat16), vh,
                      preferred_element_type=jnp.float32))
        m_scr[head] = m_new

    @pl.when(ki == nk - 1)
    def _finalize():
        # Normalize each head in place (EUP reciprocal), then fuse the output
        # projection and write the lane-dense [tq, hidden] tile.
        for head in range(h):
            lo = head * d_k
            inv_l = pl.reciprocal(l_scr[head], approx=True)        # [tq, 1]
            acc_scr[:, lo:lo + d_k] = acc_scr[:, lo:lo + d_k] * inv_l
        ctx = acc_scr[...].astype(jnp.bfloat16)                    # [tq, hidden]
        y = (jnp.dot(ctx, wo_ref[...], preferred_element_type=jnp.float32)
             + bo_ref[...])
        o_ref[...] = y.astype(o_ref.dtype)


def multi_headed_attention(params, query, key, value, h, *, tq=None, tk=None):
    """query/key/value: [B, S, hidden] -> [B, S, hidden] (single fused kernel)."""
    B, S, hidden = query.shape
    assert hidden % h == 0

    # Tile sizes: use full S when small, 128-row tiles at production sizes.
    if tq is None:
        tq = S if S <= 128 else 128
    if tk is None:
        tk = S if S <= 128 else 128
    assert S % tq == 0 and S % tk == 0  # TODO(synk): pad/mask ragged sequence lengths.

    f32, bf16 = jnp.float32, jnp.bfloat16
    # Weights fed as bf16 (MXU-native); biases stay f32 (added to f32 accumulators).
    wq = params["wq"].astype(bf16)
    wk = params["wk"].astype(bf16)
    wv = params["wv"].astype(bf16)
    wo = params["wo"].astype(bf16)
    bq = params["bq"].reshape(1, hidden).astype(f32)
    bk = params["bk"].reshape(1, hidden).astype(f32)
    bv = params["bv"].reshape(1, hidden).astype(f32)
    bo = params["bo"].reshape(1, hidden).astype(f32)

    q_spec = pl.BlockSpec((None, tq, hidden), lambda b, qi, ki: (b, qi, 0))
    kv_spec = pl.BlockSpec((None, tk, hidden), lambda b, qi, ki: (b, ki, 0))
    # Constant block index => fetched once, resident for the whole grid.
    w_spec = pl.BlockSpec((hidden, hidden), lambda b, qi, ki: (0, 0))
    b_spec = pl.BlockSpec((1, hidden), lambda b, qi, ki: (0, 0))
    o_spec = pl.BlockSpec((None, tq, hidden), lambda b, qi, ki: (b, qi, 0))

    kernel = functools.partial(_mha_flash_kernel, h=h)
    return pl.pallas_call(
        kernel,
        out_shape=jax.ShapeDtypeStruct((B, S, hidden), query.dtype),
        grid=(B, S // tq, S // tk),
        in_specs=[q_spec, kv_spec, kv_spec,
                  w_spec, b_spec, w_spec, b_spec, w_spec, b_spec,
                  w_spec, b_spec],
        out_specs=o_spec,
        scratch_shapes=[
            pltpu.VMEM((tq, hidden), bf16),   # projected & pre-scaled Q tile
            pltpu.VMEM((h, tq, 1), f32),      # running max per head
            pltpu.VMEM((h, tq, 1), f32),      # running softmax denom per head
            pltpu.VMEM((tq, hidden), f32),    # per-head context acc (lane offsets)
        ],
        compiler_params=pltpu.CompilerParams(
            dimension_semantics=("parallel", "parallel", "arbitrary"),
            vmem_limit_bytes=48 * 1024 * 1024),
    )(query, key, value, wq, bq, wk, bk, wv, bv, wo, bo)


# ---------------------------------------------------------------------------
# Pure-JAX reference (eval-mode PyTorch semantics, exact f32) for correctness.
# ---------------------------------------------------------------------------
def _reference(params, query, key, value, h):
    B, S, hidden = query.shape
    d_k = hidden // h

    def proj(x, w, b):
        y = jnp.einsum("bsk,kn->bsn", x, w) + b
        return y.reshape(B, S, h, d_k).transpose(0, 2, 1, 3)

    q = proj(query, params["wq"], params["bq"])
    k = proj(key, params["wk"], params["bk"])
    v = proj(value, params["wv"], params["bv"])
    scores = jnp.einsum("bhqd,bhkd->bhqk", q, k) / math.sqrt(d_k)
    p = jax.nn.softmax(scores, axis=-1)
    x = jnp.einsum("bhqk,bhkd->bhqd", p, v)
    x = x.transpose(0, 2, 1, 3).reshape(B, S, hidden)
    return jnp.einsum("bsk,kn->bsn", x, params["wo"]) + params["bo"]


# ---------------------------------------------------------------------------
if __name__ == "__main__":
    B, S, hidden, h = 2, 8, 32, 4

    key0 = jax.random.PRNGKey(0)
    keys = jax.random.split(key0, 12)

    # PyTorch Linear: y = x @ W.T + b with W [out, in]; store W transposed to [in, out].
    bound = 1.0 / math.sqrt(hidden)

    def make_linear(kw, kb):
        w_pt = jax.random.uniform(kw, (hidden, hidden), jnp.float32, -bound, bound)
        b = jax.random.uniform(kb, (hidden,), jnp.float32, -bound, bound)
        return w_pt.T, b

    wq, bq = make_linear(keys[0], keys[1])
    wk, bk = make_linear(keys[2], keys[3])
    wv, bv = make_linear(keys[4], keys[5])
    wo, bo = make_linear(keys[6], keys[7])
    params = dict(wq=wq, bq=bq, wk=wk, bk=bk, wv=wv, bv=bv, wo=wo, bo=bo)

    query = jax.random.normal(keys[8], (B, S, hidden), jnp.float32)
    key_in = jax.random.normal(keys[9], (B, S, hidden), jnp.float32)
    value = jax.random.normal(keys[10], (B, S, hidden), jnp.float32)

    out = multi_headed_attention(params, query, key_in, value, h)
    out = jax.block_until_ready(out)

    ref = jax.block_until_ready(_reference(params, query, key_in, value, h))
    assert out.shape == (B, S, hidden)
    # bf16 MXU path + approx reciprocal -> slightly looser tolerance than pure f32.
    assert jnp.allclose(out, ref, atol=5e-2, rtol=5e-2), "mismatch vs reference"

    print("KERNEL_OK")
</pallas_src>

<mosaic_0001>
module attributes {stable_mosaic.version = 11 : i64} {
  func.func @_mha_flash_kernel(%arg0: i32, %arg1: i32, %arg2: i32, %arg3: memref<1x8x32xf32, #tpu.memory_space<vmem>>, %arg4: memref<1x8x32xf32, #tpu.memory_space<vmem>>, %arg5: memref<1x8x32xf32, #tpu.memory_space<vmem>>, %arg6: memref<32x32xbf16, #tpu.memory_space<vmem>>, %arg7: memref<1x32xf32, #tpu.memory_space<vmem>>, %arg8: memref<32x32xbf16, #tpu.memory_space<vmem>>, %arg9: memref<1x32xf32, #tpu.memory_space<vmem>>, %arg10: memref<32x32xbf16, #tpu.memory_space<vmem>>, %arg11: memref<1x32xf32, #tpu.memory_space<vmem>>, %arg12: memref<32x32xbf16, #tpu.memory_space<vmem>>, %arg13: memref<1x32xf32, #tpu.memory_space<vmem>>, %arg14: memref<1x8x32xf32, #tpu.memory_space<vmem>>, %arg15: memref<8x32xbf16, #tpu.memory_space<vmem>>, %arg16: memref<4x8x1xf32, #tpu.memory_space<vmem>>, %arg17: memref<4x8x1xf32, #tpu.memory_space<vmem>>, %arg18: memref<8x32xf32, #tpu.memory_space<vmem>>) attributes {dimension_semantics = [#tpu.dimension_semantics<parallel>, #tpu.dimension_semantics<parallel>, #tpu.dimension_semantics<arbitrary>], iteration_bounds = array<i64: 2, 1, 1>, scalar_prefetch = 0 : i64, scratch_operands = 4 : i64, tpu.core_type = #tpu.core_type<tc>, window_params = [{transform_indices = @transform_0, window_bounds = array<i64: 1, 8, 32>}, {transform_indices = @transform_1, window_bounds = array<i64: 1, 8, 32>}, {transform_indices = @transform_2, window_bounds = array<i64: 1, 8, 32>}, {pipeline_mode = #tpu.pipeline_mode<synchronous>, transform_indices = @transform_3, window_bounds = array<i64: 32, 32>}, {pipeline_mode = #tpu.pipeline_mode<synchronous>, transform_indices = @transform_4, window_bounds = array<i64: 1, 32>}, {pipeline_mode = #tpu.pipeline_mode<synchronous>, transform_indices = @transform_5, window_bounds = array<i64: 32, 32>}, {pipeline_mode = #tpu.pipeline_mode<synchronous>, transform_indices = @transform_6, window_bounds = array<i64: 1, 32>}, {pipeline_mode = #tpu.pipeline_mode<synchronous>, transform_indices = @transform_7, window_bounds = array<i64: 32, 32>}, {pipeline_mode = #tpu.pipeline_mode<synchronous>, transform_indices = @transform_8, window_bounds = array<i64: 1, 32>}, {pipeline_mode = #tpu.pipeline_mode<synchronous>, transform_indices = @transform_9, window_bounds = array<i64: 32, 32>}, {pipeline_mode = #tpu.pipeline_mode<synchronous>, transform_indices = @transform_10, window_bounds = array<i64: 1, 32>}, {transform_indices = @transform_11, window_bounds = array<i64: 1, 8, 32>}]} {
    %c0_i32 = arith.constant 0 : i32
    %0 = arith.cmpi eq, %arg2, %c0_i32 : i32
    %1 = arith.extui %0 : i1 to i32
    %c0_i32_0 = arith.constant 0 : i32
    %2 = arith.cmpi ne, %1, %c0_i32_0 : i32
    scf.if %2 {
      %c0_99 = arith.constant 0 : index
      %c0_100 = arith.constant 0 : index
      %c0_101 = arith.constant 0 : index
      %156 = vector.load %arg3[%c0_99, %c0_100, %c0_101] : memref<1x8x32xf32, #tpu.memory_space<vmem>>, vector<1x8x32xf32>
      %157 = vector.shape_cast %156 : vector<1x8x32xf32> to vector<8x32xf32>
      %158 = arith.truncf %157 : vector<8x32xf32> to vector<8x32xbf16>
      %c0_102 = arith.constant 0 : index
      %c0_103 = arith.constant 0 : index
      %159 = vector.load %arg6[%c0_102, %c0_103] : memref<32x32xbf16, #tpu.memory_space<vmem>>, vector<32x32xbf16>
      %cst_104 = arith.constant dense<0.000000e+00> : vector<8x32xf32>
      %160 = tpu.matmul %158, %159, %cst_104 {dimension_numbers = #tpu.dot_dimension_numbers<[1], [0], [0], [1], [0, 0, 1, 1], [], []>} : vector<8x32xbf16>, vector<32x32xbf16>, vector<8x32xf32> -> vector<8x32xf32>
      %c0_105 = arith.constant 0 : index
      %c0_106 = arith.constant 0 : index
      %161 = vector.load %arg7[%c0_105, %c0_106] : memref<1x32xf32, #tpu.memory_space<vmem>>, vector<1x32xf32>
      %162 = vector.broadcast %161 : vector<1x32xf32> to vector<8x32xf32>
      %163 = arith.addf %160, %162 : vector<8x32xf32>
      %cst_107 = arith.constant 0.353553385 : f32
      %164 = vector.broadcast %cst_107 : f32 to vector<8x32xf32>
      %165 = arith.mulf %163, %164 : vector<8x32xf32>
      %166 = arith.truncf %165 : vector<8x32xf32> to vector<8x32xbf16>
      %c0_108 = arith.constant 0 : index
      %c0_109 = arith.constant 0 : index
      %167 = vector.load %arg15[%c0_108, %c0_109] : memref<8x32xbf16, #tpu.memory_space<vmem>>, vector<8x32xbf16>
      tpu.vector_store %arg15[%c0_108, %c0_109], %166 {strides = array<i32>} : memref<8x32xbf16, #tpu.memory_space<vmem>>, vector<8x32xbf16>,
      %cst_110 = arith.constant 0xFF800000 : f32
      %168 = vector.broadcast %cst_110 : f32 to vector<4x8x1xf32>
      %c0_111 = arith.constant 0 : index
      %c0_112 = arith.constant 0 : index
      %c0_113 = arith.constant 0 : index
      %169 = vector.load %arg16[%c0_111, %c0_112, %c0_113] : memref<4x8x1xf32, #tpu.memory_space<vmem>>, vector<4x8x1xf32>
      tpu.vector_store %arg16[%c0_111, %c0_112, %c0_113], %168 {strides = array<i32>} : memref<4x8x1xf32, #tpu.memory_space<vmem>>, vector<4x8x1xf32>,
      %cst_114 = arith.constant 0.000000e+00 : f32
      %170 = vector.broadcast %cst_114 : f32 to vector<4x8x1xf32>
      %c0_115 = arith.constant 0 : index
      %c0_116 = arith.constant 0 : index
      %c0_117 = arith.constant 0 : index
      %171 = vector.load %arg17[%c0_115, %c0_116, %c0_117] : memref<4x8x1xf32, #tpu.memory_space<vmem>>, vector<4x8x1xf32>
      tpu.vector_store %arg17[%c0_115, %c0_116, %c0_117], %170 {strides = array<i32>} : memref<4x8x1xf32, #tpu.memory_space<vmem>>, vector<4x8x1xf32>,
      %cst_118 = arith.constant 0.000000e+00 : f32
      %172 = vector.broadcast %cst_118 : f32 to vector<8x32xf32>
      %c0_119 = arith.constant 0 : index
      %c0_120 = arith.constant 0 : index
      %173 = vector.load %arg18[%c0_119, %c0_120] : memref<8x32xf32, #tpu.memory_space<vmem>>, vector<8x32xf32>
      tpu.vector_store %arg18[%c0_119, %c0_120], %172 {strides = array<i32>} : memref<8x32xf32, #tpu.memory_space<vmem>>, vector<8x32xf32>,
    } else {
    }
    %c0 = arith.constant 0 : index
    %c0_1 = arith.constant 0 : index
    %c0_2 = arith.constant 0 : index
    %3 = vector.load %arg4[%c0, %c0_1, %c0_2] : memref<1x8x32xf32, #tpu.memory_space<vmem>>, vector<1x8x32xf32>
    %4 = vector.shape_cast %3 : vector<1x8x32xf32> to vector<8x32xf32>
    %5 = arith.truncf %4 : vector<8x32xf32> to vector<8x32xbf16>
    %c0_3 = arith.constant 0 : index
    %c0_4 = arith.constant 0 : index
    %c0_5 = arith.constant 0 : index
    %6 = vector.load %arg5[%c0_3, %c0_4, %c0_5] : memref<1x8x32xf32, #tpu.memory_space<vmem>>, vector<1x8x32xf32>
    %7 = vector.shape_cast %6 : vector<1x8x32xf32> to vector<8x32xf32>
    %8 = arith.truncf %7 : vector<8x32xf32> to vector<8x32xbf16>
    %c0_6 = arith.constant 0 : index
    %c0_7 = arith.constant 0 : index
    %9 = vector.load %arg8[%c0_6, %c0_7] : memref<32x32xbf16, #tpu.memory_space<vmem>>, vector<32x32xbf16>
    %cst = arith.constant dense<0.000000e+00> : vector<8x32xf32>
    %10 = tpu.matmul %5, %9, %cst {dimension_numbers = #tpu.dot_dimension_numbers<[1], [0], [0], [1], [0, 0, 1, 1], [], []>} : vector<8x32xbf16>, vector<32x32xbf16>, vector<8x32xf32> -> vector<8x32xf32>
    %c0_8 = arith.constant 0 : index
    %c0_9 = arith.constant 0 : index
    %11 = vector.load %arg9[%c0_8, %c0_9] : memref<1x32xf32, #tpu.memory_space<vmem>>, vector<1x32xf32>
    %12 = vector.broadcast %11 : vector<1x32xf32> to vector<8x32xf32>
    %13 = arith.addf %10, %12 : vector<8x32xf32>
    %14 = arith.truncf %13 : vector<8x32xf32> to vector<8x32xbf16>
    %c0_10 = arith.constant 0 : index
    %c0_11 = arith.constant 0 : index
    %15 = vector.load %arg10[%c0_10, %c0_11] : memref<32x32xbf16, #tpu.memory_space<vmem>>, vector<32x32xbf16>
    %cst_12 = arith.constant dense<0.000000e+00> : vector<8x32xf32>
    %16 = tpu.matmul %8, %15, %cst_12 {dimension_numbers = #tpu.dot_dimension_numbers<[1], [0], [0], [1], [0, 0, 1, 1], [], []>} : vector<8x32xbf16>, vector<32x32xbf16>, vector<8x32xf32> -> vector<8x32xf32>
    %c0_13 = arith.constant 0 : index
    %c0_14 = arith.constant 0 : index
    %17 = vector.load %arg11[%c0_13, %c0_14] : memref<1x32xf32, #tpu.memory_space<vmem>>, vector<1x32xf32>
    %18 = vector.broadcast %17 : vector<1x32xf32> to vector<8x32xf32>
    %19 = arith.addf %16, %18 : vector<8x32xf32>
    %20 = arith.truncf %19 : vector<8x32xf32> to vector<8x32xbf16>
    %c0_15 = arith.constant 0 : index
    %c0_16 = arith.constant 0 : index
    %21 = vector.load %arg15[%c0_15, %c0_16] : memref<8x32xbf16, #tpu.memory_space<vmem>>, vector<8x8xbf16>
    %22 = vector.extract_strided_slice %14 {offsets = [0, 0], sizes = [8, 8], strides = [1, 1]} : vector<8x32xbf16> to vector<8x8xbf16>
    %23 = vector.extract_strided_slice %20 {offsets = [0, 0], sizes = [8, 8], strides = [1, 1]} : vector<8x32xbf16> to vector<8x8xbf16>
    %cst_17 = arith.constant dense<0.000000e+00> : vector<8x8xf32>
    %24 = tpu.matmul %21, %22, %cst_17 {dimension_numbers = #tpu.dot_dimension_numbers<[1], [1], [0], [0], [0, 0, 1, 0], [], []>} : vector<8x8xbf16>, vector<8x8xbf16>, vector<8x8xf32> -> vector<8x8xf32>
    %c0_18 = arith.constant 0 : index
    %c0_19 = arith.constant 0 : index
    %c0_20 = arith.constant 0 : index
    %25 = vector.load %arg16[%c0_18, %c0_19, %c0_20] : memref<4x8x1xf32, #tpu.memory_space<vmem>>, vector<1x8x1xf32>
    %26 = vector.shape_cast %25 : vector<1x8x1xf32> to vector<8x1xf32>
    %cst_21 = arith.constant dense<0xFF800000> : vector<8xf32>
    %27 = vector.multi_reduction <maximumf>, %24, %cst_21 [1] : vector<8x8xf32> to vector<8xf32>
    %28 = vector.shape_cast %27 : vector<8xf32> to vector<8x1xf32>
    %29 = arith.maximumf %26, %28 : vector<8x1xf32>
    %30 = arith.subf %26, %29 : vector<8x1xf32>
    %31 = math.exp %30 : vector<8x1xf32>
    %32 = vector.broadcast %29 : vector<8x1xf32> to vector<8x8xf32>
    %33 = arith.subf %24, %32 : vector<8x8xf32>
    %34 = math.exp %33 : vector<8x8xf32>
    %c0_22 = arith.constant 0 : index
    %c0_23 = arith.constant 0 : index
    %c0_24 = arith.constant 0 : index
    %35 = vector.load %arg17[%c0_22, %c0_23, %c0_24] : memref<4x8x1xf32, #tpu.memory_space<vmem>>, vector<1x8x1xf32>
    %36 = vector.shape_cast %35 : vector<1x8x1xf32> to vector<8x1xf32>
    %37 = arith.mulf %31, %36 : vector<8x1xf32>
    %cst_25 = arith.constant dense<0.000000e+00> : vector<8xf32>
    %38 = vector.multi_reduction <add>, %34, %cst_25 [1] : vector<8x8xf32> to vector<8xf32>
    %39 = vector.shape_cast %38 : vector<8xf32> to vector<8x1xf32>
    %40 = arith.addf %37, %39 : vector<8x1xf32>
    %c0_26 = arith.constant 0 : index
    %c0_27 = arith.constant 0 : index
    %c0_28 = arith.constant 0 : index
    %41 = vector.load %arg17[%c0_26, %c0_27, %c0_28] : memref<4x8x1xf32, #tpu.memory_space<vmem>>, vector<1x8x1xf32>
    %42 = vector.shape_cast %41 : vector<1x8x1xf32> to vector<8x1xf32>
    %43 = vector.shape_cast %40 : vector<8x1xf32> to vector<1x8x1xf32>
    tpu.vector_store %arg17[%c0_26, %c0_27, %c0_28], %43 {strides = array<i32>} : memref<4x8x1xf32, #tpu.memory_space<vmem>>, vector<1x8x1xf32>,
    %c0_29 = arith.constant 0 : index
    %c0_30 = arith.constant 0 : index
    %44 = vector.load %arg18[%c0_29, %c0_30] : memref<8x32xf32, #tpu.memory_space<vmem>>, vector<8x8xf32>
    %45 = vector.broadcast %31 : vector<8x1xf32> to vector<8x8xf32>
    %46 = arith.mulf %45, %44 : vector<8x8xf32>
    %47 = arith.truncf %34 : vector<8x8xf32> to vector<8x8xbf16>
    %cst_31 = arith.constant dense<0.000000e+00> : vector<8x8xf32>
    %48 = tpu.matmul %47, %23, %cst_31 {dimension_numbers = #tpu.dot_dimension_numbers<[1], [0], [0], [1], [0, 0, 1, 1], [], []>} : vector<8x8xbf16>, vector<8x8xbf16>, vector<8x8xf32> -> vector<8x8xf32>
    %49 = arith.addf %46, %48 : vector<8x8xf32>
    %c0_32 = arith.constant 0 : index
    %c0_33 = arith.constant 0 : index
    %50 = vector.load %arg18[%c0_32, %c0_33] : memref<8x32xf32, #tpu.memory_space<vmem>>, vector<8x8xf32>
    tpu.vector_store %arg18[%c0_32, %c0_33], %49 {strides = array<i32>} : memref<8x32xf32, #tpu.memory_space<vmem>>, vector<8x8xf32>,
    %c0_34 = arith.constant 0 : index
    %c0_35 = arith.constant 0 : index
    %c0_36 = arith.constant 0 : index
    %51 = vector.load %arg16[%c0_34, %c0_35, %c0_36] : memref<4x8x1xf32, #tpu.memory_space<vmem>>, vector<1x8x1xf32>
    %52 = vector.shape_cast %51 : vector<1x8x1xf32> to vector<8x1xf32>
    %53 = vector.shape_cast %29 : vector<8x1xf32> to vector<1x8x1xf32>
    tpu.vector_store %arg16[%c0_34, %c0_35, %c0_36], %53 {strides = array<i32>} : memref<4x8x1xf32, #tpu.memory_space<vmem>>, vector<1x8x1xf32>,
    %c0_37 = arith.constant 0 : index
    %c8 = arith.constant 8 : index
    %54 = vector.load %arg15[%c0_37, %c8] : memref<8x32xbf16, #tpu.memory_space<vmem>>, vector<8x8xbf16>
    %55 = vector.extract_strided_slice %14 {offsets = [0, 8], sizes = [8, 8], strides = [1, 1]} : vector<8x32xbf16> to vector<8x8xbf16>
    %56 = vector.extract_strided_slice %20 {offsets = [0, 8], sizes = [8, 8], strides = [1, 1]} : vector<8x32xbf16> to vector<8x8xbf16>
    %cst_38 = arith.constant dense<0.000000e+00> : vector<8x8xf32>
    %57 = tpu.matmul %54, %55, %cst_38 {dimension_numbers = #tpu.dot_dimension_numbers<[1], [1], [0], [0], [0, 0, 1, 0], [], []>} : vector<8x8xbf16>, vector<8x8xbf16>, vector<8x8xf32> -> vector<8x8xf32>
    %c1 = arith.constant 1 : index
    %c0_39 = arith.constant 0 : index
    %c0_40 = arith.constant 0 : index
    %58 = vector.load %arg16[%c1, %c0_39, %c0_40] : memref<4x8x1xf32, #tpu.memory_space<vmem>>, vector<1x8x1xf32>
    %59 = vector.shape_cast %58 : vector<1x8x1xf32> to vector<8x1xf32>
    %cst_41 = arith.constant dense<0xFF800000> : vector<8xf32>
    %60 = vector.multi_reduction <maximumf>, %57, %cst_41 [1] : vector<8x8xf32> to vector<8xf32>
    %61 = vector.shape_cast %60 : vector<8xf32> to vector<8x1xf32>
    %62 = arith.maximumf %59, %61 : vector<8x1xf32>
    %63 = arith.subf %59, %62 : vector<8x1xf32>
    %64 = math.exp %63 : vector<8x1xf32>
    %65 = vector.broadcast %62 : vector<8x1xf32> to vector<8x8xf32>
    %66 = arith.subf %57, %65 : vector<8x8xf32>
    %67 = math.exp %66 : vector<8x8xf32>
    %c1_42 = arith.constant 1 : index
    %c0_43 = arith.constant 0 : index
    %c0_44 = arith.constant 0 : index
    %68 = vector.load %arg17[%c1_42, %c0_43, %c0_44] : memref<4x8x1xf32, #tpu.memory_space<vmem>>, vector<1x8x1xf32>
    %69 = vector.shape_cast %68 : vector<1x8x1xf32> to vector<8x1xf32>
    %70 = arith.mulf %64, %69 : vector<8x1xf32>
    %cst_45 = arith.constant dense<0.000000e+00> : vector<8xf32>
    %71 = vector.multi_reduction <add>, %67, %cst_45 [1] : vector<8x8xf32> to vector<8xf32>
    %72 = vector.shape_cast %71 : vector<8xf32> to vector<8x1xf32>
    %73 = arith.addf %70, %72 : vector<8x1xf32>
    %c1_46 = arith.constant 1 : index
    %c0_47 = arith.constant 0 : index
    %c0_48 = arith.constant 0 : index
    %74 = vector.load %arg17[%c1_46, %c0_47, %c0_48] : memref<4x8x1xf32, #tpu.memory_space<vmem>>, vector<1x8x1xf32>
    %75 = vector.shape_cast %74 : vector<1x8x1xf32> to vector<8x1xf32>
    %76 = vector.shape_cast %73 : vector<8x1xf32> to vector<1x8x1xf32>
    tpu.vector_store %arg17[%c1_46, %c0_47, %c0_48], %76 {strides = array<i32>} : memref<4x8x1xf32, #tpu.memory_space<vmem>>, vector<1x8x1xf32>,
    %c0_49 = arith.constant 0 : index
    %c8_50 = arith.constant 8 : index
    %77 = vector.load %arg18[%c0_49, %c8_50] : memref<8x32xf32, #tpu.memory_space<vmem>>, vector<8x8xf32>
    %78 = vector.broadcast %64 : vector<8x1xf32> to vector<8x8xf32>
    %79 = arith.mulf %78, %77 : vector<8x8xf32>
    %80 = arith.truncf %67 : vector<8x8xf32> to vector<8x8xbf16>
    %cst_51 = arith.constant dense<0.000000e+00> : vector<8x8xf32>
    %81 = tpu.matmul %80, %56, %cst_51 {dimension_numbers = #tpu.dot_dimension_numbers<[1], [0], [0], [1], [0, 0, 1, 1], [], []>} : vector<8x8xbf16>, vector<8x8xbf16>, vector<8x8xf32> -> vector<8x8xf32>
    %82 = arith.addf %79, %81 : vector<8x8xf32>
    %c0_52 = arith.constant 0 : index
    %c8_53 = arith.constant 8 : index
    %83 = vector.load %arg18[%c0_52, %c8_53] : memref<8x32xf32, #tpu.memory_space<vmem>>, vector<8x8xf32>
    tpu.vector_store %arg18[%c0_52, %c8_53], %82 {strides = array<i32>} : memref<8x32xf32, #tpu.memory_space<vmem>>, vector<8x8xf32>,
    %c1_54 = arith.constant 1 : index
    %c0_55 = arith.constant 0 : index
    %c0_56 = arith.constant 0 : index
    %84 = vector.load %arg16[%c1_54, %c0_55, %c0_56] : memref<4x8x1xf32, #tpu.memory_space<vmem>>, vector<1x8x1xf32>
    %85 = vector.shape_cast %84 : vector<1x8x1xf32> to vector<8x1xf32>
    %86 = vector.shape_cast %62 : vector<8x1xf32> to vector<1x8x1xf32>
    tpu.vector_store %arg16[%c1_54, %c0_55, %c0_56], %86 {strides = array<i32>} : memref<4x8x1xf32, #tpu.memory_space<vmem>>, vector<1x8x1xf32>,
    %c0_57 = arith.constant 0 : index
    %c16 = arith.constant 16 : index
    %87 = vector.load %arg15[%c0_57, %c16] : memref<8x32xbf16, #tpu.memory_space<vmem>>, vector<8x8xbf16>
    %88 = vector.extract_strided_slice %14 {offsets = [0, 16], sizes = [8, 8], strides = [1, 1]} : vector<8x32xbf16> to vector<8x8xbf16>
    %89 = vector.extract_strided_slice %20 {offsets = [0, 16], sizes = [8, 8], strides = [1, 1]} : vector<8x32xbf16> to vector<8x8xbf16>
    %cst_58 = arith.constant dense<0.000000e+00> : vector<8x8xf32>
    %90 = tpu.matmul %87, %88, %cst_58 {dimension_numbers = #tpu.dot_dimension_numbers<[1], [1], [0], [0], [0, 0, 1, 0], [], []>} : vector<8x8xbf16>, vector<8x8xbf16>, vector<8x8xf32> -> vector<8x8xf32>
    %c2 = arith.constant 2 : index
    %c0_59 = arith.constant 0 : index
    %c0_60 = arith.constant 0 : index
    %91 = vector.load %arg16[%c2, %c0_59, %c0_60] : memref<4x8x1xf32, #tpu.memory_space<vmem>>, vector<1x8x1xf32>
    %92 = vector.shape_cast %91 : vector<1x8x1xf32> to vector<8x1xf32>
    %cst_61 = arith.constant dense<0xFF800000> : vector<8xf32>
    %93 = vector.multi_reduction <maximumf>, %90, %cst_61 [1] : vector<8x8xf32> to vector<8xf32>
    %94 = vector.shape_cast %93 : vector<8xf32> to vector<8x1xf32>
    %95 = arith.maximumf %92, %94 : vector<8x1xf32>
    %96 = arith.subf %92, %95 : vector<8x1xf32>
    %97 = math.exp %96 : vector<8x1xf32>
    %98 = vector.broadcast %95 : vector<8x1xf32> to vector<8x8xf32>
    %99 = arith.subf %90, %98 : vector<8x8xf32>
    %100 = math.exp %99 : vector<8x8xf32>
    %c2_62 = arith.constant 2 : index
    %c0_63 = arith.constant 0 : index
    %c0_64 = arith.constant 0 : index
    %101 = vector.load %arg17[%c2_62, %c0_63, %c0_64] : memref<4x8x1xf32, #tpu.memory_space<vmem>>, vector<1x8x1xf32>
    %102 = vector.shape_cast %101 : vector<1x8x1xf32> to vector<8x1xf32>
    %103 = arith.mulf %97, %102 : vector<8x1xf32>
    %cst_65 = arith.constant dense<0.000000e+00> : vector<8xf32>
    %104 = vector.multi_reduction <add>, %100, %cst_65 [1] : vector<8x8xf32> to vector<8xf32>
    %105 = vector.shape_cast %104 : vector<8xf32> to vector<8x1xf32>
    %106 = arith.addf %103, %105 : vector<8x1xf32>
    %c2_66 = arith.constant 2 : index
    %c0_67 = arith.constant 0 : index
    %c0_68 = arith.constant 0 : index
    %107 = vector.load %arg17[%c2_66, %c0_67, %c0_68] : memref<4x8x1xf32, #tpu.memory_space<vmem>>, vector<1x8x1xf32>
    %108 = vector.shape_cast %107 : vector<1x8x1xf32> to vector<8x1xf32>
    %109 = vector.shape_cast %106 : vector<8x1xf32> to vector<1x8x1xf32>
    tpu.vector_store %arg17[%c2_66, %c0_67, %c0_68], %109 {strides = array<i32>} : memref<4x8x1xf32, #tpu.memory_space<vmem>>, vector<1x8x1xf32>,
    %c0_69 = arith.constant 0 : index
    %c16_70 = arith.constant 16 : index
    %110 = vector.load %arg18[%c0_69, %c16_70] : memref<8x32xf32, #tpu.memory_space<vmem>>, vector<8x8xf32>
    %111 = vector.broadcast %97 : vector<8x1xf32> to vector<8x8xf32>
    %112 = arith.mulf %111, %110 : vector<8x8xf32>
    %113 = arith.truncf %100 : vector<8x8xf32> to vector<8x8xbf16>
    %cst_71 = arith.constant dense<0.000000e+00> : vector<8x8xf32>
    %114 = tpu.matmul %113, %89, %cst_71 {dimension_numbers = #tpu.dot_dimension_numbers<[1], [0], [0], [1], [0, 0, 1, 1], [], []>} : vector<8x8xbf16>, vector<8x8xbf16>, vector<8x8xf32> -> vector<8x8xf32>
    %115 = arith.addf %112, %114 : vector<8x8xf32>
    %c0_72 = arith.constant 0 : index
    %c16_73 = arith.constant 16 : index
    %116 = vector.load %arg18[%c0_72, %c16_73] : memref<8x32xf32, #tpu.memory_space<vmem>>, vector<8x8xf32>
    tpu.vector_store %arg18[%c0_72, %c16_73], %115 {strides = array<i32>} : memref<8x32xf32, #tpu.memory_space<vmem>>, vector<8x8xf32>,
    %c2_74 = arith.constant 2 : index
    %c0_75 = arith.constant 0 : index
    %c0_76 = arith.constant 0 : index
    %117 = vector.load %arg16[%c2_74, %c0_75, %c0_76] : memref<4x8x1xf32, #tpu.memory_space<vmem>>, vector<1x8x1xf32>
    %118 = vector.shape_cast %117 : vector<1x8x1xf32> to vector<8x1xf32>
    %119 = vector.shape_cast %95 : vector<8x1xf32> to vector<1x8x1xf32>
    tpu.vector_store %arg16[%c2_74, %c0_75, %c0_76], %119 {strides = array<i32>} : memref<4x8x1xf32, #tpu.memory_space<vmem>>, vector<1x8x1xf32>,
    %c0_77 = arith.constant 0 : index
    %c24 = arith.constant 24 : index
    %120 = vector.load %arg15[%c0_77, %c24] : memref<8x32xbf16, #tpu.memory_space<vmem>>, vector<8x8xbf16>
    %121 = vector.extract_strided_slice %14 {offsets = [0, 24], sizes = [8, 8], strides = [1, 1]} : vector<8x32xbf16> to vector<8x8xbf16>
    %122 = vector.extract_strided_slice %20 {offsets = [0, 24], sizes = [8, 8], strides = [1, 1]} : vector<8x32xbf16> to vector<8x8xbf16>
    %cst_78 = arith.constant dense<0.000000e+00> : vector<8x8xf32>
    %123 = tpu.matmul %120, %121, %cst_78 {dimension_numbers = #tpu.dot_dimension_numbers<[1], [1], [0], [0], [0, 0, 1, 0], [], []>} : vector<8x8xbf16>, vector<8x8xbf16>, vector<8x8xf32> -> vector<8x8xf32>
    %c3 = arith.constant 3 : index
    %c0_79 = arith.constant 0 : index
    %c0_80 = arith.constant 0 : index
    %124 = vector.load %arg16[%c3, %c0_79, %c0_80] : memref<4x8x1xf32, #tpu.memory_space<vmem>>, vector<1x8x1xf32>
    %125 = vector.shape_cast %124 : vector<1x8x1xf32> to vector<8x1xf32>
    %cst_81 = arith.constant dense<0xFF800000> : vector<8xf32>
    %126 = vector.multi_reduction <maximumf>, %123, %cst_81 [1] : vector<8x8xf32> to vector<8xf32>
    %127 = vector.shape_cast %126 : vector<8xf32> to vector<8x1xf32>
    %128 = arith.maximumf %125, %127 : vector<8x1xf32>
    %129 = arith.subf %125, %128 : vector<8x1xf32>
    %130 = math.exp %129 : vector<8x1xf32>
    %131 = vector.broadcast %128 : vector<8x1xf32> to vector<8x8xf32>
    %132 = arith.subf %123, %131 : vector<8x8xf32>
    %133 = math.exp %132 : vector<8x8xf32>
    %c3_82 = arith.constant 3 : index
    %c0_83 = arith.constant 0 : index
    %c0_84 = arith.constant 0 : index
    %134 = vector.load %arg17[%c3_82, %c0_83, %c0_84] : memref<4x8x1xf32, #tpu.memory_space<vmem>>, vector<1x8x1xf32>
    %135 = vector.shape_cast %134 : vector<1x8x1xf32> to vector<8x1xf32>
    %136 = arith.mulf %130, %135 : vector<8x1xf32>
    %cst_85 = arith.constant dense<0.000000e+00> : vector<8xf32>
    %137 = vector.multi_reduction <add>, %133, %cst_85 [1] : vector<8x8xf32> to vector<8xf32>
    %138 = vector.shape_cast %137 : vector<8xf32> to vector<8x1xf32>
    %139 = arith.addf %136, %138 : vector<8x1xf32>
    %c3_86 = arith.constant 3 : index
    %c0_87 = arith.constant 0 : index
    %c0_88 = arith.constant 0 : index
    %140 = vector.load %arg17[%c3_86, %c0_87, %c0_88] : memref<4x8x1xf32, #tpu.memory_space<vmem>>, vector<1x8x1xf32>
    %141 = vector.shape_cast %140 : vector<1x8x1xf32> to vector<8x1xf32>
    %142 = vector.shape_cast %139 : vector<8x1xf32> to vector<1x8x1xf32>
    tpu.vector_store %arg17[%c3_86, %c0_87, %c0_88], %142 {strides = array<i32>} : memref<4x8x1xf32, #tpu.memory_space<vmem>>, vector<1x8x1xf32>,
    %c0_89 = arith.constant 0 : index
    %c24_90 = arith.constant 24 : index
    %143 = vector.load %arg18[%c0_89, %c24_90] : memref<8x32xf32, #tpu.memory_space<vmem>>, vector<8x8xf32>
    %144 = vector.broadcast %130 : vector<8x1xf32> to vector<8x8xf32>
    %145 = arith.mulf %144, %143 : vector<8x8xf32>
    %146 = arith.truncf %133 : vector<8x8xf32> to vector<8x8xbf16>
    %cst_91 = arith.constant dense<0.000000e+00> : vector<8x8xf32>
    %147 = tpu.matmul %146, %122, %cst_91 {dimension_numbers = #tpu.dot_dimension_numbers<[1], [0], [0], [1], [0, 0, 1, 1], [], []>} : vector<8x8xbf16>, vector<8x8xbf16>, vector<8x8xf32> -> vector<8x8xf32>
    %148 = arith.addf %145, %147 : vector<8x8xf32>
    %c0_92 = arith.constant 0 : index
    %c24_93 = arith.constant 24 : index
    %149 = vector.load %arg18[%c0_92, %c24_93] : memref<8x32xf32, #tpu.memory_space<vmem>>, vector<8x8xf32>
    tpu.vector_store %arg18[%c0_92, %c24_93], %148 {strides = array<i32>} : memref<8x32xf32, #tpu.memory_space<vmem>>, vector<8x8xf32>,
    %c3_94 = arith.constant 3 : index
    %c0_95 = arith.constant 0 : index
    %c0_96 = arith.constant 0 : index
    %150 = vector.load %arg16[%c3_94, %c0_95, %c0_96] : memref<4x8x1xf32, #tpu.memory_space<vmem>>, vector<1x8x1xf32>
    %151 = vector.shape_cast %150 : vector<1x8x1xf32> to vector<8x1xf32>
    %152 = vector.shape_cast %128 : vector<8x1xf32> to vector<1x8x1xf32>
    tpu.vector_store %arg16[%c3_94, %c0_95, %c0_96], %152 {strides = array<i32>} : memref<4x8x1xf32, #tpu.memory_space<vmem>>, vector<1x8x1xf32>,
    %c0_i32_97 = arith.constant 0 : i32
    %153 = arith.cmpi eq, %arg2, %c0_i32_97 : i32
    %154 = arith.extui %153 : i1 to i32
    %c0_i32_98 = arith.constant 0 : i32
    %155 = arith.cmpi ne, %154, %c0_i32_98 : i32
    scf.if %155 {
      %c0_99 = arith.constant 0 : index
      %c0_100 = arith.constant 0 : index
      %c0_101 = arith.constant 0 : index
      %156 = vector.load %arg17[%c0_99, %c0_100, %c0_101] : memref<4x8x1xf32, #tpu.memory_space<vmem>>, vector<1x8x1xf32>
      %157 = vector.shape_cast %156 : vector<1x8x1xf32> to vector<8x1xf32>
      %158 = tpu.reciprocal %157 {approx = true} : vector<8x1xf32> -> vector<8x1xf32>
      %c0_102 = arith.constant 0 : index
      %c0_103 = arith.constant 0 : index
      %159 = vector.load %arg18[%c0_102, %c0_103] : memref<8x32xf32, #tpu.memory_space<vmem>>, vector<8x8xf32>
      %160 = vector.broadcast %158 : vector<8x1xf32> to vector<8x8xf32>
      %161 = arith.mulf %159, %160 : vector<8x8xf32>
      %c0_104 = arith.constant 0 : index
      %c0_105 = arith.constant 0 : index
      %162 = vector.load %arg18[%c0_104, %c0_105] : memref<8x32xf32, #tpu.memory_space<vmem>>, vector<8x8xf32>
      tpu.vector_store %arg18[%c0_104, %c0_105], %161 {strides = array<i32>} : memref<8x32xf32, #tpu.memory_space<vmem>>, vector<8x8xf32>,
      %c1_106 = arith.constant 1 : index
      %c0_107 = arith.constant 0 : index
      %c0_108 = arith.constant 0 : index
      %163 = vector.load %arg17[%c1_106, %c0_107, %c0_108] : memref<4x8x1xf32, #tpu.memory_space<vmem>>, vector<1x8x1xf32>
      %164 = vector.shape_cast %163 : vector<1x8x1xf32> to vector<8x1xf32>
      %165 = tpu.reciprocal %164 {approx = true} : vector<8x1xf32> -> vector<8x1xf32>
      %c0_109 = arith.constant 0 : index
      %c8_110 = arith.constant 8 : index
      %166 = vector.load %arg18[%c0_109, %c8_110] : memref<8x32xf32, #tpu.memory_space<vmem>>, vector<8x8xf32>
      %167 = vector.broadcast %165 : vector<8x1xf32> to vector<8x8xf32>
      %168 = arith.mulf %166, %167 : vector<8x8xf32>
      %c0_111 = arith.constant 0 : index
      %c8_112 = arith.constant 8 : index
      %169 = vector.load %arg18[%c0_111, %c8_112] : memref<8x32xf32, #tpu.memory_space<vmem>>, vector<8x8xf32>
      tpu.vector_store %arg18[%c0_111, %c8_112], %168 {strides = array<i32>} : memref<8x32xf32, #tpu.memory_space<vmem>>, vector<8x8xf32>,
      %c2_113 = arith.constant 2 : index
      %c0_114 = arith.constant 0 : index
      %c0_115 = arith.constant 0 : index
      %170 = vector.load %arg17[%c2_113, %c0_114, %c0_115] : memref<4x8x1xf32, #tpu.memory_space<vmem>>, vector<1x8x1xf32>
      %171 = vector.shape_cast %170 : vector<1x8x1xf32> to vector<8x1xf32>
      %172 = tpu.reciprocal %171 {approx = true} : vector<8x1xf32> -> vector<8x1xf32>
      %c0_116 = arith.constant 0 : index
      %c16_117 = arith.constant 16 : index
      %173 = vector.load %arg18[%c0_116, %c16_117] : memref<8x32xf32, #tpu.memory_space<vmem>>, vector<8x8xf32>
      %174 = vector.broadcast %172 : vector<8x1xf32> to vector<8x8xf32>
      %175 = arith.mulf %173, %174 : vector<8x8xf32>
      %c0_118 = arith.constant 0 : index
      %c16_119 = arith.constant 16 : index
      %176 = vector.load %arg18[%c0_118, %c16_119] : memref<8x32xf32, #tpu.memory_space<vmem>>, vector<8x8xf32>
      tpu.vector_store %arg18[%c0_118, %c16_119], %175 {strides = array<i32>} : memref<8x32xf32, #tpu.memory_space<vmem>>, vector<8x8xf32>,
      %c3_120 = arith.constant 3 : index
      %c0_121 = arith.constant 0 : index
      %c0_122 = arith.constant 0 : index
      %177 = vector.load %arg17[%c3_120, %c0_121, %c0_122] : memref<4x8x1xf32, #tpu.memory_space<vmem>>, vector<1x8x1xf32>
      %178 = vector.shape_cast %177 : vector<1x8x1xf32> to vector<8x1xf32>
      %179 = tpu.reciprocal %178 {approx = true} : vector<8x1xf32> -> vector<8x1xf32>
      %c0_123 = arith.constant 0 : index
      %c24_124 = arith.constant 24 : index
      %180 = vector.load %arg18[%c0_123, %c24_124] : memref<8x32xf32, #tpu.memory_space<vmem>>, vector<8x8xf32>
      %181 = vector.broadcast %179 : vector<8x1xf32> to vector<8x8xf32>
      %182 = arith.mulf %180, %181 : vector<8x8xf32>
      %c0_125 = arith.constant 0 : index
      %c24_126 = arith.constant 24 : index
      %183 = vector.load %arg18[%c0_125, %c24_126] : memref<8x32xf32, #tpu.memory_space<vmem>>, vector<8x8xf32>
      tpu.vector_store %arg18[%c0_125, %c24_126], %182 {strides = array<i32>} : memref<8x32xf32, #tpu.memory_space<vmem>>, vector<8x8xf32>,
      %c0_127 = arith.constant 0 : index
      %c0_128 = arith.constant 0 : index
      %184 = vector.load %arg18[%c0_127, %c0_128] : memref<8x32xf32, #tpu.memory_space<vmem>>, vector<8x32xf32>
      %185 = arith.truncf %184 : vector<8x32xf32> to vector<8x32xbf16>
      %c0_129 = arith.constant 0 : index
      %c0_130 = arith.constant 0 : index
      %186 = vector.load %arg12[%c0_129, %c0_130] : memref<32x32xbf16, #tpu.memory_space<vmem>>, vector<32x32xbf16>
      %cst_131 = arith.constant dense<0.000000e+00> : vector<8x32xf32>
      %187 = tpu.matmul %185, %186, %cst_131 {dimension_numbers = #tpu.dot_dimension_numbers<[1], [0], [0], [1], [0, 0, 1, 1], [], []>} : vector<8x32xbf16>, vector<32x32xbf16>, vector<8x32xf32> -> vector<8x32xf32>
      %c0_132 = arith.constant 0 : index
      %c0_133 = arith.constant 0 : index
      %188 = vector.load %arg13[%c0_132, %c0_133] : memref<1x32xf32, #tpu.memory_space<vmem>>, vector<1x32xf32>
      %189 = vector.broadcast %188 : vector<1x32xf32> to vector<8x32xf32>
      %190 = arith.addf %187, %189 : vector<8x32xf32>
      %c0_134 = arith.constant 0 : index
      %c0_135 = arith.constant 0 : index
      %c0_136 = arith.constant 0 : index
      %191 = vector.load %arg14[%c0_134, %c0_135, %c0_136] : memref<1x8x32xf32, #tpu.memory_space<vmem>>, vector<1x8x32xf32>
      %192 = vector.shape_cast %191 : vector<1x8x32xf32> to vector<8x32xf32>
      %193 = vector.shape_cast %190 : vector<8x32xf32> to vector<1x8x32xf32>
      tpu.vector_store %arg14[%c0_134, %c0_135, %c0_136], %193 {strides = array<i32>} : memref<1x8x32xf32, #tpu.memory_space<vmem>>, vector<1x8x32xf32>,
    } else {
    }
    return
  }
  func.func @transform_0(%arg0: i32, %arg1: i32, %arg2: i32) -> (i32, i32, i32) {
    %c0_i32 = arith.constant 0 : i32
    %c0_i32_0 = arith.constant 0 : i32
    return %arg0, %arg1, %c0_i32 : i32, i32, i32
  }
  func.func @transform_1(%arg0: i32, %arg1: i32, %arg2: i32) -> (i32, i32, i32) {
    %c0_i32 = arith.constant 0 : i32
    %c0_i32_0 = arith.constant 0 : i32
    return %arg0, %arg2, %c0_i32 : i32, i32, i32
  }
  func.func @transform_2(%arg0: i32, %arg1: i32, %arg2: i32) -> (i32, i32, i32) {
    %c0_i32 = arith.constant 0 : i32
    %c0_i32_0 = arith.constant 0 : i32
    return %arg0, %arg2, %c0_i32 : i32, i32, i32
  }
  func.func @transform_3(%arg0: i32, %arg1: i32, %arg2: i32) -> (i32, i32) {
    %c0_i32 = arith.constant 0 : i32
    %c0_i32_0 = arith.constant 0 : i32
    %c0_i32_1 = arith.constant 0 : i32
    return %c0_i32, %c0_i32_0 : i32, i32
  }
  func.func @transform_4(%arg0: i32, %arg1: i32, %arg2: i32) -> (i32, i32) {
    %c0_i32 = arith.constant 0 : i32
    %c0_i32_0 = arith.constant 0 : i32
    %c0_i32_1 = arith.constant 0 : i32
    return %c0_i32, %c0_i32_0 : i32, i32
  }
  func.func @transform_5(%arg0: i32, %arg1: i32, %arg2: i32) -> (i32, i32) {
    %c0_i32 = arith.constant 0 : i32
    %c0_i32_0 = arith.constant 0 : i32
    %c0_i32_1 = arith.constant 0 : i32
    return %c0_i32, %c0_i32_0 : i32, i32
  }
  func.func @transform_6(%arg0: i32, %arg1: i32, %arg2: i32) -> (i32, i32) {
    %c0_i32 = arith.constant 0 : i32
    %c0_i32_0 = arith.constant 0 : i32
    %c0_i32_1 = arith.constant 0 : i32
    return %c0_i32, %c0_i32_0 : i32, i32
  }
  func.func @transform_7(%arg0: i32, %arg1: i32, %arg2: i32) -> (i32, i32) {
    %c0_i32 = arith.constant 0 : i32
    %c0_i32_0 = arith.constant 0 : i32
    %c0_i32_1 = arith.constant 0 : i32
    return %c0_i32, %c0_i32_0 : i32, i32
  }
  func.func @transform_8(%arg0: i32, %arg1: i32, %arg2: i32) -> (i32, i32) {
    %c0_i32 = arith.constant 0 : i32
    %c0_i32_0 = arith.constant 0 : i32
    %c0_i32_1 = arith.constant 0 : i32
    return %c0_i32, %c0_i32_0 : i32, i32
  }
  func.func @transform_9(%arg0: i32, %arg1: i32, %arg2: i32) -> (i32, i32) {
    %c0_i32 = arith.constant 0 : i32
    %c0_i32_0 = arith.constant 0 : i32
    %c0_i32_1 = arith.constant 0 : i32
    return %c0_i32, %c0_i32_0 : i32, i32
  }
  func.func @transform_10(%arg0: i32, %arg1: i32, %arg2: i32) -> (i32, i32) {
    %c0_i32 = arith.constant 0 : i32
    %c0_i32_0 = arith.constant 0 : i32
    %c0_i32_1 = arith.constant 0 : i32
    return %c0_i32, %c0_i32_0 : i32, i32
  }
  func.func @transform_11(%arg0: i32, %arg1: i32, %arg2: i32) -> (i32, i32, i32) {
    %c0_i32 = arith.constant 0 : i32
    %c0_i32_0 = arith.constant 0 : i32
    return %arg0, %arg1, %c0_i32 : i32, i32, i32
  }
}

</mosaic_0001>

<llo_original>
// kernel: tpu_custom_call.1
$region0: #{tpu_custom_call.1}
  #allocation0 [shape = 'u32[]', space=smem, size = 0x4, offset = 0x4, fixed_abs, tag = 'smem constant byte address 0x4 - core index']
  #allocation1 [shape = 'u32[144,128]{1,0:T(1,128)}', space=vmem, size = 0x12000, scoped, tag = 'internal scratch']
  #allocation2 [shape = 'bf16[8,32]{1,0:T(8,128)(2,1)}', space=vmem, size = 0x800, scoped, tag = 'scratch operand']
  #allocation3 [shape = 'f32[4,8,1]{2,1,0:T(8,128)}', space=vmem, size = 0x4000, scoped, tag = 'scratch operand']
  #allocation4 [shape = 'f32[4,8,1]{2,1,0:T(8,128)}', space=vmem, size = 0x4000, scoped, tag = 'scratch operand']
  #allocation5 [shape = 'f32[8,32]{1,0:T(8,128)}', space=vmem, size = 0x1000, scoped, tag = 'scratch operand']
  %s0 = inlined_call_operand.hbm [shape: f32[2,8,32], index: 0, kind: input, shape index: {}]
  %s1 = inlined_call_operand.hbm [shape: f32[2,8,32], index: 1, kind: input, shape index: {}]
  %s2 = inlined_call_operand.hbm [shape: f32[2,8,32], index: 2, kind: input, shape index: {}]
  %s3 = inlined_call_operand.hbm [shape: bf16[32,32], index: 3, kind: input, shape index: {}]
  %s4 = inlined_call_operand.vmem [shape: f32[1,32], index: 4, kind: input, shape index: {}]
  %s5 = inlined_call_operand.vmem [shape: bf16[32,32], index: 5, kind: input, shape index: {}]
  %s6 = inlined_call_operand.vmem [shape: f32[1,32], index: 6, kind: input, shape index: {}]
  %s7 = inlined_call_operand.hbm [shape: bf16[32,32], index: 7, kind: input, shape index: {}]
  %s8 = inlined_call_operand.hbm [shape: f32[1,32], index: 8, kind: input, shape index: {}]
  %s9 = inlined_call_operand.vmem [shape: bf16[32,32], index: 9, kind: input, shape index: {}]
  %s10 = inlined_call_operand.vmem [shape: f32[1,32], index: 10, kind: input, shape index: {}]
  %s11 = inlined_call_operand.hbm [shape: f32[2,8,32], index: 11, kind: output, shape index: {}]
  %s12 = sld [smem:[#allocation0]]
  $region109: #{tpu_custom_call.1} parent=0
    _
  %s14 = ssub.s32 1, %s12
  %s15 = scalar_select 0, %s14, %s12
  $region1: #{tpu_custom_call.1} parent=0
    #allocation6 [shape = 'u8[8192]{0}', space=vmem, size = 0x2000, scoped, tag = 'input window, operand 0']
    #allocation7 [shape = 's32[2]{0}', space=sflag, size = 0x8, scoped, tag = 'scoped memory for tpu_custom_call.1']
    #allocation8 [shape = 's32[2]{0}', space=sflag, size = 0x8, scoped, tag = 'scoped memory for tpu_custom_call.1']
    #allocation9 [shape = 'u8[8192]{0}', space=vmem, size = 0x2000, scoped, tag = 'input window, operand 1']
    #allocation10 [shape = 's32[2]{0}', space=sflag, size = 0x8, scoped, tag = 'scoped memory for tpu_custom_call.1']
    #allocation11 [shape = 'u8[8192]{0}', space=vmem, size = 0x2000, scoped, tag = 'input window, operand 2']
    #allocation12 [shape = 'u8[8192]{0}', space=vmem, size = 0x2000, scoped, tag = 'input window, operand 3, single buffered']
    #allocation13 [shape = 's32[1]{0}', space=sflag, size = 0x4, scoped, tag = 'scoped memory for tpu_custom_call.1']
    #allocation14 [shape = 'u8[8192]{0}', space=vmem, size = 0x2000, scoped, tag = 'input window, operand 7, single buffered']
    #allocation15 [shape = 'u8[512]{0}', space=vmem, size = 0x400, scoped, tag = 'input window, operand 8, single buffered']
    #allocation16 [shape = 's32[1]{0}', space=sflag, size = 0x4, scoped, tag = 'scoped memory for tpu_custom_call.1']
    #allocation17 [shape = 'u8[8192]{0}', space=vmem, size = 0x2000, scoped, tag = 'output window, operand 0']
    %16 = vsyncpa [#allocation7], 0
    %s17 = scalar_lea.sflag [#allocation7], 1
    %18 = vsyncpa %s17, 0
    %19 = vsyncpa [#allocation10], 0
    %s20 = scalar_lea.sflag [#allocation10], 1
    %21 = vsyncpa %s20, 0
    %22 = vsyncpa [#allocation13], 0
    %23 = vsyncpa [#allocation16], 0
    %24 = vsyncpa [#allocation8], 0
    %s25 = scalar_lea.sflag [#allocation8], 1
    %26 = vsyncpa %s25, 0
    loop: start=0, step=1, limit=4
    $region2: #{tpu_custom_call.1} parent=1 // loop_pre_header
      _
    $region3: #{tpu_custom_call.1} parent=1 // loop_header
      %s28 = sphi 0, %s32
      %p29 = scmp.ge.s32.totalorder %s28, 4
      %s35 = sphi 0, %s54
      %s36 = sphi 0, %s50
      %s37 = sphi 0, %s46
      %s38 = sphi 0, %s35
      %s39 = sphi 0, %s36
      %s40 = sphi 0, %s37
      %s41 = sphi 0, %s38
      %s42 = sphi 0, %s39
      %s43 = sphi 0, %s40
      %s59 = sphi 0, %s61
      %s62 = sphi 0, %s59
      %s63 = sphi 0, %s62
      %s79 = sphi 0, %s63
      %s87 = sphi 0, %s89
      %s90 = sphi 0, %s87
      %s91 = sphi 0, %s90
      %s107 = sphi 0, %s91
      %s115 = sphi 0, %s117
      %s118 = sphi 0, %s115
      %s119 = sphi 0, %s118
      %s135 = sphi 0, %s119
      %s139 = sphi 0, %s139
      %s141 = sphi 0, %s139
      %s142 = sphi 0, %s141
      %s156 = sphi 0, %s142
      %s160 = sphi 0, %s160
      %s162 = sphi 0, %s160
      %s163 = sphi 0, %s162
      %s177 = sphi 0, %s163
      %s181 = sphi 0, %s181
      %s183 = sphi 0, %s181
      %s184 = sphi 0, %s183
      %s198 = sphi 0, %s184
      %s202 = sphi 0, %s202
      %s204 = sphi 0, %s202
      %s205 = sphi 0, %s204
      %s219 = sphi 0, %s205
      %s223 = sphi 0, %s223
      %s225 = sphi 0, %s223
      %s226 = sphi 0, %s225
      %s240 = sphi 0, %s226
      %s244 = sphi 0, %s244
      %s246 = sphi 0, %s244
      %s247 = sphi 0, %s246
      %s261 = sphi 0, %s247
      %s265 = sphi 0, %s265
      %s267 = sphi 0, %s265
      %s268 = sphi 0, %s267
      %s282 = sphi 0, %s268
      %s286 = sphi 0, %s286
      %s288 = sphi 0, %s286
      %s289 = sphi 0, %s288
      %s303 = sphi 0, %s289
      %s311 = sphi 0, %s313
      %s314 = sphi 0, %s311
      %s315 = sphi 0, %s314
      %s331 = sphi 0, %s315
    $region4: #{tpu_custom_call.1} parent=1 // loop_header_branch
      %31 = sbr.rel (%p29) target = $region8
    $region5: #{tpu_custom_call.1} parent=1 // loop_body
      %s33 = ssub.s32 %s28, 1
      %s34 = ssub.s32 %s28, 2
      %s44 = sadd.s32 1, %s37
      %p45 = scmp.ge.s32.totalorder %s44, 1
      %s46 = scalar_select %p45, 0, %s44
      %s47 = sadd.s32 1, %s36
      %s48 = scalar_select %p45, %s47, %s36
      %p49 = scmp.ge.s32.totalorder %s48, 1
      %s50 = scalar_select %p49, 0, %s48
      %s51 = sadd.s32 1, %s35
      %s52 = scalar_select %p49, %s51, %s35
      %p53 = scmp.ge.s32.totalorder %s52, 2
      %s54 = scalar_select %p53, 0, %s52
      %s55 = ssub.s32 %s35, %s54
      %s56 = ssub.s32 %s36, %s50
      %s57 = sor.u32 %s55, %s56
      %p58 = scmp.eq.s32.totalorder %s57, 0
      %s60 = sadd.s32 %s59, 1
      %s61 = scalar_select %p58, %s59, %s60
      %p64 = pneg %p58
      %p65 = scmp.eq.s32.totalorder %s28, 1
      %p66 = por %p64, %p65
      %p67 = scmp.ne.s32.totalorder %s59, %s62
      %p68 = scmp.eq.s32.totalorder %s28, 0
      %p69 = por %p67, %p68
      %p70 = scmp.ne.s32.totalorder %s59, %s62
      %p71 = scmp.eq.s32.totalorder %s33, 1
      %p72 = por %p70, %p71
      %p73 = scmp.ne.s32.totalorder %s62, %s63
      %p74 = scmp.eq.s32.totalorder %s33, 0
      %p75 = por %p73, %p74
      %p76 = scmp.ne.s32.totalorder %s62, %s63
      %p77 = scmp.eq.s32.totalorder %s34, 1
      %p78 = por %p76, %p77
      %p80 = scmp.ne.s32.totalorder %s63, %s79
      %p81 = scmp.eq.s32.totalorder %s34, 0
      %p82 = por %p80, %p81
      %s83 = ssub.s32 %s35, %s54
      %s84 = ssub.s32 %s37, %s46
      %s85 = sor.u32 %s83, %s84
      %p86 = scmp.eq.s32.totalorder %s85, 0
      %s88 = sadd.s32 %s87, 1
      %s89 = scalar_select %p86, %s87, %s88
      %p92 = pneg %p86
      %p93 = scmp.eq.s32.totalorder %s28, 1
      %p94 = por %p92, %p93
      %p95 = scmp.ne.s32.totalorder %s87, %s90
      %p96 = scmp.eq.s32.totalorder %s28, 0
      %p97 = por %p95, %p96
      %p98 = scmp.ne.s32.totalorder %s87, %s90
      %p99 = scmp.eq.s32.totalorder %s33, 1
      %p100 = por %p98, %p99
      %p101 = scmp.ne.s32.totalorder %s90, %s91
      %p102 = scmp.eq.s32.totalorder %s33, 0
      %p103 = por %p101, %p102
      %p104 = scmp.ne.s32.totalorder %s90, %s91
      %p105 = scmp.eq.s32.totalorder %s34, 1
      %p106 = por %p104, %p105
      %p108 = scmp.ne.s32.totalorder %s91, %s107
      %p109 = scmp.eq.s32.totalorder %s34, 0
      %p110 = por %p108, %p109
      %s111 = ssub.s32 %s35, %s54
      %s112 = ssub.s32 %s37, %s46
      %s113 = sor.u32 %s111, %s112
      %p114 = scmp.eq.s32.totalorder %s113, 0
      %s116 = sadd.s32 %s115, 1
      %s117 = scalar_select %p114, %s115, %s116
      %p120 = pneg %p114
      %p121 = scmp.eq.s32.totalorder %s28, 1
      %p122 = por %p120, %p121
      %p123 = scmp.ne.s32.totalorder %s115, %s118
      %p124 = scmp.eq.s32.totalorder %s28, 0
      %p125 = por %p123, %p124
      %p126 = scmp.ne.s32.totalorder %s115, %s118
      %p127 = scmp.eq.s32.totalorder %s33, 1
      %p128 = por %p126, %p127
      %p129 = scmp.ne.s32.totalorder %s118, %s119
      %p130 = scmp.eq.s32.totalorder %s33, 0
      %p131 = por %p129, %p130
      %p132 = scmp.ne.s32.totalorder %s118, %s119
      %p133 = scmp.eq.s32.totalorder %s34, 1
      %p134 = por %p132, %p133
      %p136 = scmp.ne.s32.totalorder %s119, %s135
      %p137 = scmp.eq.s32.totalorder %s34, 0
      %p138 = por %p136, %p137
      %s140 = sadd.s32 %s139, 1
      %p143 = scmp.eq.s32.totalorder %s28, 1
      %p144 = scmp.ne.s32.totalorder %s139, %s141
      %p145 = scmp.eq.s32.totalorder %s28, 0
      %p146 = por %p144, %p145
      %p147 = scmp.ne.s32.totalorder %s139, %s141
      %p148 = scmp.eq.s32.totalorder %s33, 1
      %p149 = por %p147, %p148
      %p150 = scmp.ne.s32.totalorder %s141, %s142
      %p151 = scmp.eq.s32.totalorder %s33, 0
      %p152 = por %p150, %p151
      %p153 = scmp.ne.s32.totalorder %s141, %s142
      %p154 = scmp.eq.s32.totalorder %s34, 1
      %p155 = por %p153, %p154
      %p157 = scmp.ne.s32.totalorder %s142, %s156
      %p158 = scmp.eq.s32.totalorder %s34, 0
      %p159 = por %p157, %p158
      %s161 = sadd.s32 %s160, 1
      %p164 = scmp.eq.s32.totalorder %s28, 1
      %p165 = scmp.ne.s32.totalorder %s160, %s162
      %p166 = scmp.eq.s32.totalorder %s28, 0
      %p167 = por %p165, %p166
      %p168 = scmp.ne.s32.totalorder %s160, %s162
      %p169 = scmp.eq.s32.totalorder %s33, 1
      %p170 = por %p168, %p169
      %p171 = scmp.ne.s32.totalorder %s162, %s163
      %p172 = scmp.eq.s32.totalorder %s33, 0
      %p173 = por %p171, %p172
      %p174 = scmp.ne.s32.totalorder %s162, %s163
      %p175 = scmp.eq.s32.totalorder %s34, 1
      %p176 = por %p174, %p175
      %p178 = scmp.ne.s32.totalorder %s163, %s177
      %p179 = scmp.eq.s32.totalorder %s34, 0
      %p180 = por %p178, %p179
      %s182 = sadd.s32 %s181, 1
      %p185 = scmp.eq.s32.totalorder %s28, 1
      %p186 = scmp.ne.s32.totalorder %s181, %s183
      %p187 = scmp.eq.s32.totalorder %s28, 0
      %p188 = por %p186, %p187
      %p189 = scmp.ne.s32.totalorder %s181, %s183
      %p190 = scmp.eq.s32.totalorder %s33, 1
      %p191 = por %p189, %p190
      %p192 = scmp.ne.s32.totalorder %s183, %s184
      %p193 = scmp.eq.s32.totalorder %s33, 0
      %p194 = por %p192, %p193
      %p195 = scmp.ne.s32.totalorder %s183, %s184
      %p196 = scmp.eq.s32.totalorder %s34, 1
      %p197 = por %p195, %p196
      %p199 = scmp.ne.s32.totalorder %s184, %s198
      %p200 = scmp.eq.s32.totalorder %s34, 0
      %p201 = por %p199, %p200
      %s203 = sadd.s32 %s202, 1
      %p206 = scmp.eq.s32.totalorder %s28, 1
      %p207 = scmp.ne.s32.totalorder %s202, %s204
      %p208 = scmp.eq.s32.totalorder %s28, 0
      %p209 = por %p207, %p208
      %p210 = scmp.ne.s32.totalorder %s202, %s204
      %p211 = scmp.eq.s32.totalorder %s33, 1
      %p212 = por %p210, %p211
      %p213 = scmp.ne.s32.totalorder %s204, %s205
      %p214 = scmp.eq.s32.totalorder %s33, 0
      %p215 = por %p213, %p214
      %p216 = scmp.ne.s32.totalorder %s204, %s205
      %p217 = scmp.eq.s32.totalorder %s34, 1
      %p218 = por %p216, %p217
      %p220 = scmp.ne.s32.totalorder %s205, %s219
      %p221 = scmp.eq.s32.totalorder %s34, 0
      %p222 = por %p220, %p221
      %s224 = sadd.s32 %s223, 1
      %p227 = scmp.eq.s32.totalorder %s28, 1
      %p228 = scmp.ne.s32.totalorder %s223, %s225
      %p229 = scmp.eq.s32.totalorder %s28, 0
      %p230 = por %p228, %p229
      %p231 = scmp.ne.s32.totalorder %s223, %s225
      %p232 = scmp.eq.s32.totalorder %s33, 1
      %p233 = por %p231, %p232
      %p234 = scmp.ne.s32.totalorder %s225, %s226
      %p235 = scmp.eq.s32.totalorder %s33, 0
      %p236 = por %p234, %p235
      %p237 = scmp.ne.s32.totalorder %s225, %s226
      %p238 = scmp.eq.s32.totalorder %s34, 1
      %p239 = por %p237, %p238
      %p241 = scmp.ne.s32.totalorder %s226, %s240
      %p242 = scmp.eq.s32.totalorder %s34, 0
      %p243 = por %p241, %p242
      %s245 = sadd.s32 %s244, 1
      %p248 = scmp.eq.s32.totalorder %s28, 1
      %p249 = scmp.ne.s32.totalorder %s244, %s246
      %p250 = scmp.eq.s32.totalorder %s28, 0
      %p251 = por %p249, %p250
      %p252 = scmp.ne.s32.totalorder %s244, %s246
      %p253 = scmp.eq.s32.totalorder %s33, 1
      %p254 = por %p252, %p253
      %p255 = scmp.ne.s32.totalorder %s246, %s247
      %p256 = scmp.eq.s32.totalorder %s33, 0
      %p257 = por %p255, %p256
      %p258 = scmp.ne.s32.totalorder %s246, %s247
      %p259 = scmp.eq.s32.totalorder %s34, 1
      %p260 = por %p258, %p259
      %p262 = scmp.ne.s32.totalorder %s247, %s261
      %p263 = scmp.eq.s32.totalorder %s34, 0
      %p264 = por %p262, %p263
      %s266 = sadd.s32 %s265, 1
      %p269 = scmp.eq.s32.totalorder %s28, 1
      %p270 = scmp.ne.s32.totalorder %s265, %s267
      %p271 = scmp.eq.s32.totalorder %s28, 0
      %p272 = por %p270, %p271
      %p273 = scmp.ne.s32.totalorder %s265, %s267
      %p274 = scmp.eq.s32.totalorder %s33, 1
      %p275 = por %p273, %p274
      %p276 = scmp.ne.s32.totalorder %s267, %s268
      %p277 = scmp.eq.s32.totalorder %s33, 0
      %p278 = por %p276, %p277
      %p279 = scmp.ne.s32.totalorder %s267, %s268
      %p280 = scmp.eq.s32.totalorder %s34, 1
      %p281 = por %p279, %p280
      %p283 = scmp.ne.s32.totalorder %s268, %s282
      %p284 = scmp.eq.s32.totalorder %s34, 0
      %p285 = por %p283, %p284
      %s287 = sadd.s32 %s286, 1
      %p290 = scmp.eq.s32.totalorder %s28, 1
      %p291 = scmp.ne.s32.totalorder %s286, %s288
      %p292 = scmp.eq.s32.totalorder %s28, 0
      %p293 = por %p291, %p292
      %p294 = scmp.ne.s32.totalorder %s286, %s288
      %p295 = scmp.eq.s32.totalorder %s33, 1
      %p296 = por %p294, %p295
      %p297 = scmp.ne.s32.totalorder %s288, %s289
      %p298 = scmp.eq.s32.totalorder %s33, 0
      %p299 = por %p297, %p298
      %p300 = scmp.ne.s32.totalorder %s288, %s289
      %p301 = scmp.eq.s32.totalorder %s34, 1
      %p302 = por %p300, %p301
      %p304 = scmp.ne.s32.totalorder %s289, %s303
      %p305 = scmp.eq.s32.totalorder %s34, 0
      %p306 = por %p304, %p305
      %s307 = ssub.s32 %s35, %s54
      %s308 = ssub.s32 %s36, %s50
      %s309 = sor.u32 %s307, %s308
      %p310 = scmp.eq.s32.totalorder %s309, 0
      %s312 = sadd.s32 %s311, 1
      %s313 = scalar_select %p310, %s311, %s312
      %p316 = pneg %p310
      %p317 = scmp.eq.s32.totalorder %s28, 1
      %p318 = por %p316, %p317
      %p319 = scmp.ne.s32.totalorder %s311, %s314
      %p320 = scmp.eq.s32.totalorder %s28, 0
      %p321 = por %p319, %p320
      %p322 = scmp.ne.s32.totalorder %s311, %s314
      %p323 = scmp.eq.s32.totalorder %s33, 1
      %p324 = por %p322, %p323
      %p325 = scmp.ne.s32.totalorder %s314, %s315
      %p326 = scmp.eq.s32.totalorder %s33, 0
      %p327 = por %p325, %p326
      %p328 = scmp.ne.s32.totalorder %s314, %s315
      %p329 = scmp.eq.s32.totalorder %s34, 1
      %p330 = por %p328, %p329
      %p332 = scmp.ne.s32.totalorder %s315, %s331
      %p333 = scmp.eq.s32.totalorder %s34, 0
      %p334 = por %p332, %p333
      %p335 = scmp.le.s32.totalorder 1, %s28
      %p336 = scmp.lt.s32.totalorder %s28, 3
      %p337 = pnand %p335, %p336
      %p338 = pneg %p337
      // Predicated region
      $region9: #{tpu_custom_call.1} parent=5 // pred_check
        _
      $region10: #{tpu_custom_call.1} parent=5 // pred_check_branch
        %340 = sbr.rel (%p337) target = $region12
      $region11: #{tpu_custom_call.1} parent=5 // pred_region
        %s341 = ssub.s32 %s28, 1
        // Predicated region
        $region13: #{tpu_custom_call.1} parent=11 // pred_check
          %p342 = pneg %p152
        $region14: #{tpu_custom_call.1} parent=11 // pred_check_branch
          %344 = sbr.rel (%p342) target = $region16
        $region15: #{tpu_custom_call.1} parent=11 // pred_region
          %s346 = ssub.s32 256, 256
          %347 = vsyncadd [#allocation13], %s346
          %s348 = sshll.u32 [#allocation12], 4
          %s349 = int_to_ptr.vmem [resolvable:$true] %s348
          %354 = dma.hbm_to_vmem [thread:$0]  %s3, 256, %s349, [#allocation13], 64, 64, 4
        $region16: #{tpu_custom_call.1} parent=11 // pred_fallthru
          _
        // Predicated region
        $region17: #{tpu_custom_call.1} parent=11 // pred_check
          %p355 = pneg %p173
        $region18: #{tpu_custom_call.1} parent=11 // pred_check_branch
          %357 = sbr.rel (%p355) target = $region20
        $region19: #{tpu_custom_call.1} parent=11 // pred_region
          _
        $region20: #{tpu_custom_call.1} parent=11 // pred_fallthru
          _
        // Predicated region
        $region21: #{tpu_custom_call.1} parent=11 // pred_check
          %p358 = pneg %p194
        $region22: #{tpu_custom_call.1} parent=11 // pred_check_branch
          %360 = sbr.rel (%p358) target = $region24
        $region23: #{tpu_custom_call.1} parent=11 // pred_region
          _
        $region24: #{tpu_custom_call.1} parent=11 // pred_fallthru
          _
        // Predicated region
        $region25: #{tpu_custom_call.1} parent=11 // pred_check
          %p361 = pneg %p215
        $region26: #{tpu_custom_call.1} parent=11 // pred_check_branch
          %363 = sbr.rel (%p361) target = $region28
        $region27: #{tpu_custom_call.1} parent=11 // pred_region
          _
        $region28: #{tpu_custom_call.1} parent=11 // pred_fallthru
          _
        // Predicated region
        $region29: #{tpu_custom_call.1} parent=11 // pred_check
          %p364 = pneg %p236
        $region30: #{tpu_custom_call.1} parent=11 // pred_check_branch
          %366 = sbr.rel (%p364) target = $region32
        $region31: #{tpu_custom_call.1} parent=11 // pred_region
          %s368 = ssub.s32 256, 256
          %369 = vsyncadd [#allocation13], %s368
          %s370 = sshll.u32 [#allocation14], 4
          %s371 = int_to_ptr.vmem [resolvable:$true] %s370
          %376 = dma.hbm_to_vmem [thread:$0]  %s7, 256, %s371, [#allocation13], 64, 64, 4
        $region32: #{tpu_custom_call.1} parent=11 // pred_fallthru
          _
        // Predicated region
        $region33: #{tpu_custom_call.1} parent=11 // pred_check
          %p377 = pneg %p257
        $region34: #{tpu_custom_call.1} parent=11 // pred_check_branch
          %379 = sbr.rel (%p377) target = $region36
        $region35: #{tpu_custom_call.1} parent=11 // pred_region
          %s381 = ssub.s32 16, 16
          %382 = vsyncadd [#allocation16], %s381
          %s384 = sshll.u32 [#allocation15], 4
          %s385 = int_to_ptr.vmem [resolvable:$true] %s384
          %387 = dma.hbm_to_vmem [thread:$0]  %s8, 16, %s385, [#allocation16]
        $region36: #{tpu_custom_call.1} parent=11 // pred_fallthru
          _
        // Predicated region
        $region37: #{tpu_custom_call.1} parent=11 // pred_check
          %p388 = pneg %p278
        $region38: #{tpu_custom_call.1} parent=11 // pred_check_branch
          %390 = sbr.rel (%p388) target = $region40
        $region39: #{tpu_custom_call.1} parent=11 // pred_region
          _
        $region40: #{tpu_custom_call.1} parent=11 // pred_fallthru
          _
        // Predicated region
        $region41: #{tpu_custom_call.1} parent=11 // pred_check
          %p391 = pneg %p299
        $region42: #{tpu_custom_call.1} parent=11 // pred_check_branch
          %393 = sbr.rel (%p391) target = $region44
        $region43: #{tpu_custom_call.1} parent=11 // pred_region
          _
        $region44: #{tpu_custom_call.1} parent=11 // pred_fallthru
          _
      $region12: #{tpu_custom_call.1} parent=5 // pred_fallthru
        _
      %p394 = scmp.lt.s32.totalorder %s28, 2
      // Predicated region
      $region45: #{tpu_custom_call.1} parent=5 // pred_check
        %p395 = pneg %p394
      $region46: #{tpu_custom_call.1} parent=5 // pred_check_branch
        %397 = sbr.rel (%p395) target = $region48
      $region47: #{tpu_custom_call.1} parent=5 // pred_region
        // Predicated region
        $region49: #{tpu_custom_call.1} parent=47 // pred_check
          %p398 = pneg %p69
        $region50: #{tpu_custom_call.1} parent=47 // pred_check_branch
          %400 = sbr.rel (%p398) target = $region52
        $region51: #{tpu_custom_call.1} parent=47 // pred_region
          %s401 = sand.u32 %s59, 1
          %s402 = scalar_lea.sflag [#allocation7], %s401
          %s403 = sand.u32 %s59, 1
          %s404 = smul.addr %s403, 8
          %s405 = scalar_lea.vmem [#allocation6], %s404
          %s407 = ssub.s32 128, 128
          %408 = vsyncadd %s402, %s407
          %s409 = sadd.s32 %s36, %s35
          %s410 = smul.addr %s409, 128
          %s411 = scalar_lea.hbm %s0, %s410
          %s413 = sshll.u32 %s405, 4
          %s414 = int_to_ptr.vmem [resolvable:$true] %s413
          %416 = dma.hbm_to_vmem [thread:$0]  %s411, 128, %s414, %s402
        $region52: #{tpu_custom_call.1} parent=47 // pred_fallthru
          _
        // Predicated region
        $region53: #{tpu_custom_call.1} parent=47 // pred_check
          %p417 = pneg %p97
        $region54: #{tpu_custom_call.1} parent=47 // pred_check_branch
          %419 = sbr.rel (%p417) target = $region56
        $region55: #{tpu_custom_call.1} parent=47 // pred_region
          %s420 = sand.u32 %s28, 1
          %s421 = scalar_lea.sflag [#allocation10], %s420
          %s422 = sand.u32 %s87, 1
          %s423 = smul.addr %s422, 8
          %s424 = scalar_lea.vmem [#allocation9], %s423
          %s426 = ssub.s32 128, 128
          %427 = vsyncadd %s421, %s426
          %s428 = sadd.s32 %s37, %s35
          %s429 = smul.addr %s428, 128
          %s430 = scalar_lea.hbm %s1, %s429
          %s432 = sshll.u32 %s424, 4
          %s433 = int_to_ptr.vmem [resolvable:$true] %s432
          %435 = dma.hbm_to_vmem [thread:$0]  %s430, 128, %s433, %s421
        $region56: #{tpu_custom_call.1} parent=47 // pred_fallthru
          _
        // Predicated region
        $region57: #{tpu_custom_call.1} parent=47 // pred_check
          %p436 = pneg %p125
        $region58: #{tpu_custom_call.1} parent=47 // pred_check_branch
          %438 = sbr.rel (%p436) target = $region60
        $region59: #{tpu_custom_call.1} parent=47 // pred_region
          %s439 = sand.u32 %s28, 1
          %s440 = scalar_lea.sflag [#allocation10], %s439
          %s441 = sand.u32 %s115, 1
          %s442 = smul.addr %s441, 8
          %s443 = scalar_lea.vmem [#allocation11], %s442
          %s445 = ssub.s32 128, 128
          %446 = vsyncadd %s440, %s445
          %s447 = sadd.s32 %s37, %s35
          %s448 = smul.addr %s447, 128
          %s449 = scalar_lea.hbm %s2, %s448
          %s451 = sshll.u32 %s443, 4
          %s452 = int_to_ptr.vmem [resolvable:$true] %s451
          %454 = dma.hbm_to_vmem [thread:$0]  %s449, 128, %s452, %s440
        $region60: #{tpu_custom_call.1} parent=47 // pred_fallthru
          _
      $region48: #{tpu_custom_call.1} parent=5 // pred_fallthru
        _
      %p455 = scmp.le.s32.totalorder 1, %s28
      %p456 = scmp.lt.s32.totalorder %s28, 3
      %p457 = pnand %p455, %p456
      %p458 = pneg %p457
      // Predicated region
      $region61: #{tpu_custom_call.1} parent=5 // pred_check
        _
      $region62: #{tpu_custom_call.1} parent=5 // pred_check_branch
        %460 = sbr.rel (%p457) target = $region64
      $region63: #{tpu_custom_call.1} parent=5 // pred_region
        %s461 = ssub.s32 %s28, 1
        %s462 = sand.u32 %s62, 1
        %s463 = scalar_lea.sflag [#allocation7], %s462
        %s464 = sand.u32 %s62, 1
        %s465 = smul.addr %s464, 8
        %s466 = scalar_lea.vmem [#allocation6], %s465
        // Predicated region
        $region65: #{tpu_custom_call.1} parent=63 // pred_check
          %p467 = pneg %p75
        $region66: #{tpu_custom_call.1} parent=63 // pred_check_branch
          %469 = sbr.rel (%p467) target = $region68
        $region67: #{tpu_custom_call.1} parent=63 // pred_region
          %470 = dma.done %s463, 128
        $region68: #{tpu_custom_call.1} parent=63 // pred_fallthru
          _
        %s471 = sand.u32 %s33, 1
        %s472 = scalar_lea.sflag [#allocation10], %s471
        %s473 = sand.u32 %s90, 1
        %s474 = smul.addr %s473, 8
        %s475 = scalar_lea.vmem [#allocation9], %s474
        // Predicated region
        $region69: #{tpu_custom_call.1} parent=63 // pred_check
          %p476 = pneg %p103
        $region70: #{tpu_custom_call.1} parent=63 // pred_check_branch
          %478 = sbr.rel (%p476) target = $region72
        $region71: #{tpu_custom_call.1} parent=63 // pred_region
          %479 = dma.done %s472, 128
        $region72: #{tpu_custom_call.1} parent=63 // pred_fallthru
          _
        %s480 = sand.u32 %s33, 1
        %s481 = scalar_lea.sflag [#allocation10], %s480
        %s482 = sand.u32 %s118, 1
        %s483 = smul.addr %s482, 8
        %s484 = scalar_lea.vmem [#allocation11], %s483
        // Predicated region
        $region73: #{tpu_custom_call.1} parent=63 // pred_check
          %p485 = pneg %p131
        $region74: #{tpu_custom_call.1} parent=63 // pred_check_branch
          %487 = sbr.rel (%p485) target = $region76
        $region75: #{tpu_custom_call.1} parent=63 // pred_region
          %488 = dma.done %s481, 128
        $region76: #{tpu_custom_call.1} parent=63 // pred_fallthru
          _
        // Predicated region
        $region77: #{tpu_custom_call.1} parent=63 // pred_check
          %p489 = pneg %p152
        $region78: #{tpu_custom_call.1} parent=63 // pred_check_branch
          %491 = sbr.rel (%p489) target = $region80
        $region79: #{tpu_custom_call.1} parent=63 // pred_region
          %492 = dma.done [#allocation13], 256
        $region80: #{tpu_custom_call.1} parent=63 // pred_fallthru
          _
        // Predicated region
        $region81: #{tpu_custom_call.1} parent=63 // pred_check
          %p493 = pneg %p236
        $region82: #{tpu_custom_call.1} parent=63 // pred_check_branch
          %495 = sbr.rel (%p493) target = $region84
        $region83: #{tpu_custom_call.1} parent=63 // pred_region
          %496 = dma.done [#allocation13], 256
        $region84: #{tpu_custom_call.1} parent=63 // pred_fallthru
          _
        // Predicated region
        $region85: #{tpu_custom_call.1} parent=63 // pred_check
          %p497 = pneg %p257
        $region86: #{tpu_custom_call.1} parent=63 // pred_check_branch
          %499 = sbr.rel (%p497) target = $region88
        $region87: #{tpu_custom_call.1} parent=63 // pred_region
          %500 = dma.done [#allocation16], 16
        $region88: #{tpu_custom_call.1} parent=63 // pred_fallthru
          _
        %s501 = sand.u32 %s62, 1
        %s502 = scalar_lea.sflag [#allocation7], %s501
        %s503 = sand.u32 %s62, 1
        %s504 = smul.addr %s503, 8
        %s505 = scalar_lea.vmem [#allocation6], %s504
        %p506 = pneg %p75
        %p507 = pneg %p72
        %s508 = sand.u32 %s33, 1
        %s509 = scalar_lea.sflag [#allocation10], %s508
        %s510 = sand.u32 %s90, 1
        %s511 = smul.addr %s510, 8
        %s512 = scalar_lea.vmem [#allocation9], %s511
        %p513 = pneg %p103
        %p514 = pneg %p100
        %s515 = sand.u32 %s33, 1
        %s516 = scalar_lea.sflag [#allocation10], %s515
        %s517 = sand.u32 %s118, 1
        %s518 = smul.addr %s517, 8
        %s519 = scalar_lea.vmem [#allocation11], %s518
        %p520 = pneg %p131
        %p521 = pneg %p128
        %p522 = pneg %p152
        %p523 = pneg %p149
        %p524 = pneg %p173
        %p525 = pneg %p170
        %p526 = pneg %p194
        %p527 = pneg %p191
        %p528 = pneg %p215
        %p529 = pneg %p212
        %p530 = pneg %p236
        %p531 = pneg %p233
        %p532 = pneg %p257
        %p533 = pneg %p254
        %p534 = pneg %p278
        %p535 = pneg %p275
        %p536 = pneg %p299
        %p537 = pneg %p296
        %p538 = pneg %p327
        %p539 = pneg %p324
        %s540 = sand.u32 %s314, 1
        %s541 = scalar_lea.sflag [#allocation8], %s540
        %s542 = sand.u32 %s314, 1
        %s543 = smul.addr %s542, 8
        %s544 = scalar_lea.vmem [#allocation17], %s543
        %p546 = scmp.eq.s32.totalorder %s40, 0
        // Predicated region
        $region89: #{tpu_custom_call.1} parent=63 // pred_check
          %p547 = pneg %p546
        $region90: #{tpu_custom_call.1} parent=63 // pred_check_branch
          %549 = sbr.rel (%p547) target = $region92
        $region91: #{tpu_custom_call.1} parent=63 // pred_region
          %v550 = vld [vmem:[%s466] sm:$0xff]
          %v551 = vpack.c.bf16 %v550, %v550
          %v552 = vld [vmem:[#allocation12] sm:$0xf]
          %v553 = vld [vmem:[#allocation12 + $0x4] sm:$0xf]
          %v554 = vld [vmem:[#allocation12 + $0x8] sm:$0xf]
          %v555 = vld [vmem:[#allocation12 + $0xc] sm:$0xf]
          %v556 = vld [vmem:[%s4] sm:$0x1]
          %v558 = vlaneseq
          %v559 = vshrl.u32 %v558, 7
          %v560 = vsub.s32 0, %v559
          %v561 = vrot.slane %v556, %v560
          %v567 = vunpack.c.l.b16 %v552
          %v568 = vunpack.c.l.b16 %v553
          %v569 = vunpack.c.l.b16 %v554
          %v570 = vunpack.c.l.b16 %v555
          %v571 = vpack.c.b16 %v568, %v567
          %v572 = vpack.c.b16 %v570, %v569
          %vm575 = vcmask 261120
          %v577 = vsel %vm575, %v551, 0
          %579 = vmatprep.subr.bf16.mxu0 0
          %580 = vmatpush1.bf16.msra.mxu0 %v571
          %581 = vmatprep.subr.bf16.mxu0 0
          %582 = vmatpush1.bf16.msra.mxu0 %v572
          %583 = vmatprep.subr.bf16.mxu0 0
          %584 = vmatpush1.bf16.msra.mxu0 0
          %585 = vmatprep.subr.bf16.mxu0 0
          %586 = vmatpush1.bf16.msra.mxu0 0
          %587 = vmatprep.subr.bf16.mxu0 0
          %588 = vmatpush1.bf16.msra.mxu0 0
          %589 = vmatprep.subr.bf16.mxu0 0
          %590 = vmatpush1.bf16.msra.mxu0 0
          %591 = vmatprep.subr.bf16.mxu0 0
          %592 = vmatpush1.bf16.msra.mxu0 0
          %593 = vmatprep.subr.bf16.mxu0 0
          %594 = vmatpush1.bf16.msra.mxu0 0
          %595 = vmatprep.subr.bf16.mxu0 0
          %596 = vmatpush1.bf16.msra.mxu0 0
          %597 = vmatprep.subr.bf16.mxu0 0
          %598 = vmatpush1.bf16.msra.mxu0 0
          %599 = vmatprep.subr.bf16.mxu0 0
          %600 = vmatpush1.bf16.msra.mxu0 0
          %601 = vmatprep.subr.bf16.mxu0 0
          %602 = vmatpush1.bf16.msra.mxu0 0
          %603 = vmatprep.subr.bf16.mxu0 0
          %604 = vmatpush1.bf16.msra.mxu0 0
          %605 = vmatprep.subr.bf16.mxu0 0
          %606 = vmatpush1.bf16.msra.mxu0 0
          %607 = vmatprep.subr.bf16.mxu0 0
          %608 = vmatpush1.bf16.msra.mxu0 0
          %609 = vmatprep.subr.bf16.mxu0 0
          %610 = vmatpush1.bf16.msra.mxu0 0
          %611 = vmatprep.mubr.bf16.mxu0 0
          %612 = vmatmul.mubr.bf16.gmra.mrb[0].mxu0 %v577
          %v613 = vpop.f32.mrb[0].mxu0
          %v614 = vadd.f32 %v561, %v613
          %v615 = vpop.f32.mrb[0].mxu0
          %v616 = vpop.f32.mrb[0].mxu0
          %v617 = vpop.f32.mrb[0].mxu0
          %618 = vdwg.mxu0
          %v619 = vmul.f32 %v614, 0.35355338
          %v620 = vpack.c.bf16 %v619, %v619
          %vm621 = vcmask 257024
          %622 = vst.msk [vmem:[#allocation2] sm:$0xf] %vm621, %v620
          %vm623 = vcmask 7168
          %624 = vst.msk [vmem:[#allocation3] sm:$0xff] %vm623, -inf
          %625 = vst.msk [vmem:[#allocation3 + $0x8] sm:$0xff] %vm623, -inf
          %626 = vst.msk [vmem:[#allocation3 + $0x10] sm:$0xff] %vm623, -inf
          %627 = vst.msk [vmem:[#allocation3 + $0x18] sm:$0xff] %vm623, -inf
          %628 = vst.msk [vmem:[#allocation4] sm:$0xff] %vm623, 0.0
          %629 = vst.msk [vmem:[#allocation4 + $0x8] sm:$0xff] %vm623, 0.0
          %630 = vst.msk [vmem:[#allocation4 + $0x10] sm:$0xff] %vm623, 0.0
          %631 = vst.msk [vmem:[#allocation4 + $0x18] sm:$0xff] %vm623, 0.0
          %632 = vst.msk [vmem:[#allocation5] sm:$0xff] %vm575, 0.0
        $region92: #{tpu_custom_call.1} parent=63 // pred_fallthru
          _
        %v633 = vld [vmem:[%s475] sm:$0xff]
        %v634 = vpack.c.bf16 %v633, %v633
        %v635 = vld [vmem:[%s484] sm:$0xff]
        %v636 = vpack.c.bf16 %v635, %v635
        %v637 = vld [vmem:[%s5] sm:$0xf]
        %v638 = vld [vmem:[%s5 + $0x4] sm:$0xf]
        %v639 = vld [vmem:[%s5 + $0x8] sm:$0xf]
        %v640 = vld [vmem:[%s5 + $0xc] sm:$0xf]
        %v641 = vld [vmem:[%s6] sm:$0x1]
        %v643 = vlaneseq
        %v644 = vshrl.u32 %v643, 7
        %v645 = vsub.s32 0, %v644
        %v646 = vrot.slane %v641, %v645
        %v652 = vunpack.c.l.b16 %v637
        %v653 = vunpack.c.l.b16 %v638
        %v654 = vunpack.c.l.b16 %v639
        %v655 = vunpack.c.l.b16 %v640
        %v656 = vpack.c.b16 %v653, %v652
        %v657 = vpack.c.b16 %v655, %v654
        %vm660 = vcmask 261120
        %v662 = vsel %vm660, %v634, 0
        %664 = vmatprep.subr.bf16.mxu0 0
        %665 = vmatpush1.bf16.msra.mxu0 %v656
        %666 = vmatprep.subr.bf16.mxu0 0
        %667 = vmatpush1.bf16.msra.mxu0 %v657
        %668 = vmatprep.subr.bf16.mxu0 0
        %669 = vmatpush1.bf16.msra.mxu0 0
        %670 = vmatprep.subr.bf16.mxu0 0
        %671 = vmatpush1.bf16.msra.mxu0 0
        %672 = vmatprep.subr.bf16.mxu0 0
        %673 = vmatpush1.bf16.msra.mxu0 0
        %674 = vmatprep.subr.bf16.mxu0 0
        %675 = vmatpush1.bf16.msra.mxu0 0
        %676 = vmatprep.subr.bf16.mxu0 0
        %677 = vmatpush1.bf16.msra.mxu0 0
        %678 = vmatprep.subr.bf16.mxu0 0
        %679 = vmatpush1.bf16.msra.mxu0 0
        %680 = vmatprep.subr.bf16.mxu0 0
        %681 = vmatpush1.bf16.msra.mxu0 0
        %682 = vmatprep.subr.bf16.mxu0 0
        %683 = vmatpush1.bf16.msra.mxu0 0
        %684 = vmatprep.subr.bf16.mxu0 0
        %685 = vmatpush1.bf16.msra.mxu0 0
        %686 = vmatprep.subr.bf16.mxu0 0
        %687 = vmatpush1.bf16.msra.mxu0 0
        %688 = vmatprep.subr.bf16.mxu0 0
        %689 = vmatpush1.bf16.msra.mxu0 0
        %690 = vmatprep.subr.bf16.mxu0 0
        %691 = vmatpush1.bf16.msra.mxu0 0
        %692 = vmatprep.subr.bf16.mxu0 0
        %693 = vmatpush1.bf16.msra.mxu0 0
        %694 = vmatprep.subr.bf16.mxu0 0
        %695 = vmatpush1.bf16.msra.mxu0 0
        %696 = vmatprep.mubr.bf16.mxu0 0
        %697 = vmatmul.mubr.bf16.gmra.mrb[0].mxu0 %v662
        %v698 = vpop.f32.mrb[0].mxu0
        %v699 = vadd.f32 %v646, %v698
        %v700 = vpop.f32.mrb[0].mxu0
        %v701 = vpop.f32.mrb[0].mxu0
        %v702 = vpop.f32.mrb[0].mxu0
        %703 = vdwg.mxu0
        %v704 = vpack.c.bf16 %v699, %v699
        %v705 = vld [vmem:[#allocation14] sm:$0xf]
        %v706 = vld [vmem:[#allocation14 + $0x4] sm:$0xf]
        %v707 = vld [vmem:[#allocation14 + $0x8] sm:$0xf]
        %v708 = vld [vmem:[#allocation14 + $0xc] sm:$0xf]
        %v709 = vld [vmem:[#allocation15] sm:$0x1]
        %v711 = vlaneseq
        %v712 = vshrl.u32 %v711, 7
        %v713 = vsub.s32 0, %v712
        %v714 = vrot.slane %v709, %v713
        %v720 = vunpack.c.l.b16 %v705
        %v721 = vunpack.c.l.b16 %v706
        %v722 = vunpack.c.l.b16 %v707
        %v723 = vunpack.c.l.b16 %v708
        %v724 = vpack.c.b16 %v721, %v720
        %v725 = vpack.c.b16 %v723, %v722
        %v729 = vsel %vm660, %v636, 0
        %731 = vmatprep.subr.bf16.mxu0 0
        %732 = vmatpush1.bf16.msra.mxu0 %v724
        %733 = vmatprep.subr.bf16.mxu0 0
        %734 = vmatpush1.bf16.msra.mxu0 %v725
        %735 = vmatprep.subr.bf16.mxu0 0
        %736 = vmatpush1.bf16.msra.mxu0 0
        %737 = vmatprep.subr.bf16.mxu0 0
        %738 = vmatpush1.bf16.msra.mxu0 0
        %739 = vmatprep.subr.bf16.mxu0 0
        %740 = vmatpush1.bf16.msra.mxu0 0
        %741 = vmatprep.subr.bf16.mxu0 0
        %742 = vmatpush1.bf16.msra.mxu0 0
        %743 = vmatprep.subr.bf16.mxu0 0
        %744 = vmatpush1.bf16.msra.mxu0 0
        %745 = vmatprep.subr.bf16.mxu0 0
        %746 = vmatpush1.bf16.msra.mxu0 0
        %747 = vmatprep.subr.bf16.mxu0 0
        %748 = vmatpush1.bf16.msra.mxu0 0
        %749 = vmatprep.subr.bf16.mxu0 0
        %750 = vmatpush1.bf16.msra.mxu0 0
        %751 = vmatprep.subr.bf16.mxu0 0
        %752 = vmatpush1.bf16.msra.mxu0 0
        %753 = vmatprep.subr.bf16.mxu0 0
        %754 = vmatpush1.bf16.msra.mxu0 0
        %755 = vmatprep.subr.bf16.mxu0 0
        %756 = vmatpush1.bf16.msra.mxu0 0
        %757 = vmatprep.subr.bf16.mxu0 0
        %758 = vmatpush1.bf16.msra.mxu0 0
        %759 = vmatprep.subr.bf16.mxu0 0
        %760 = vmatpush1.bf16.msra.mxu0 0
        %761 = vmatprep.subr.bf16.mxu0 0
        %762 = vmatpush1.bf16.msra.mxu0 0
        %763 = vmatprep.mubr.bf16.mxu0 0
        %764 = vmatmul.mubr.bf16.gmra.mrb[0].mxu0 %v729
        %v765 = vpop.f32.mrb[0].mxu0
        %v766 = vadd.f32 %v714, %v765
        %v767 = vpop.f32.mrb[0].mxu0
        %v768 = vpop.f32.mrb[0].mxu0
        %v769 = vpop.f32.mrb[0].mxu0
        %770 = vdwg.mxu0
        %v771 = vpack.c.bf16 %v766, %v766
        %v772 = vld [vmem:[#allocation2] sm:$0xf]
        %vm773 = vcmask 64512
        %v775 = vsel %vm773, %v772, 0
        %v778 = vsel %vm773, %v704, 0
        %780 = vmatprep.subr.bf16.mxu0 0
        %781 = vmatpush1.bf16.xpose.msra.mxu0 %v778
        %782 = vmatprep.subr.bf16.mxu0 0
        %783 = vmatpush1.bf16.xpose.msra.mxu0 0
        %784 = vmatprep.subr.bf16.mxu0 0
        %785 = vmatpush1.bf16.xpose.msra.mxu0 0
        %786 = vmatprep.subr.bf16.mxu0 0
        %787 = vmatpush1.bf16.xpose.msra.mxu0 0
        %788 = vmatprep.subr.bf16.mxu0 0
        %789 = vmatpush1.bf16.xpose.msra.mxu0 0
        %790 = vmatprep.subr.bf16.mxu0 0
        %791 = vmatpush1.bf16.xpose.msra.mxu0 0
        %792 = vmatprep.subr.bf16.mxu0 0
        %793 = vmatpush1.bf16.xpose.msra.mxu0 0
        %794 = vmatprep.subr.bf16.mxu0 0
        %795 = vmatpush1.bf16.xpose.msra.mxu0 0
        %796 = vmatprep.subr.bf16.mxu0 0
        %797 = vmatpush1.bf16.xpose.msra.mxu0 0
        %798 = vmatprep.subr.bf16.mxu0 0
        %799 = vmatpush1.bf16.xpose.msra.mxu0 0
        %800 = vmatprep.subr.bf16.mxu0 0
        %801 = vmatpush1.bf16.xpose.msra.mxu0 0
        %802 = vmatprep.subr.bf16.mxu0 0
        %803 = vmatpush1.bf16.xpose.msra.mxu0 0
        %804 = vmatprep.subr.bf16.mxu0 0
        %805 = vmatpush1.bf16.xpose.msra.mxu0 0
        %806 = vmatprep.subr.bf16.mxu0 0
        %807 = vmatpush1.bf16.xpose.msra.mxu0 0
        %808 = vmatprep.subr.bf16.mxu0 0
        %809 = vmatpush1.bf16.xpose.msra.mxu0 0
        %810 = vmatprep.subr.bf16.mxu0 0
        %811 = vmatpush1.bf16.xpose.msra.mxu0 0
        %812 = vmatprep.mubr.bf16.mxu0 0
        %813 = vmatmul.mubr.bf16.gmra.mrb[0].mxu0 %v775
        %v814 = vpop.f32.mrb[0].mxu0
        %v815 = vadd.f32 0.0, %v814
        %v816 = vpop.f32.mrb[0].mxu0
        %v817 = vpop.f32.mrb[0].mxu0
        %v818 = vpop.f32.mrb[0].mxu0
        %819 = vdwg.mxu0
        %v820 = vld [vmem:[#allocation3] sm:$0xff]
        %v821 = vsel %vm773, %v815, -inf
        %822 = vmax.xlane.f32.xlu0 %v821
        %v823 = vpop.xlane.xlu0 %822
        %v824 = vmax.f32 %v820, %v823
        %v825 = vsub.f32 %v820, %v824
        %v826 = vmul.f32 %v825, 1.442695
        %v827 = vpow.pop %v826
        %829 = vset.pattern.permute.xlu0 0
        %830 = vperm.xlu0 %829, %v824
        %v831 = vpop.permute.xlu0 %830
        %v833 = vsub.f32 %v815, %v831
        %v834 = vmul.f32 %v833, 1.442695
        %v835 = vpow.pop %v834
        %v836 = vld [vmem:[#allocation4] sm:$0xff]
        %v837 = vmul.f32 %v827, %v836
        %v838 = vsel %vm773, %v835, 0.0
        %839 = vadd.xlane.f32.xlu0 %v838
        %v840 = vpop.xlane.xlu0 %839
        %v841 = vadd.f32 %v837, %v840
        %vm842 = vcmask 7168
        %843 = vst.msk [vmem:[#allocation4] sm:$0xff] %vm842, %v841
        %v844 = vld [vmem:[#allocation5] sm:$0xff]
        %846 = vset.pattern.permute.xlu0 0
        %847 = vperm.xlu0 %846, %v827
        %v848 = vpop.permute.xlu0 %847
        %v850 = vmul.f32 %v848, %v844
        %v851 = vpack.c.bf16 %v835, %v835
        %v853 = vsel %vm773, %v851, 0
        %vm855 = vcmask 1043456
        %v857 = vsel %vm855, %v771, 0
        %859 = vmatprep.subr.bf16.mxu0 0
        %860 = vmatpush1.bf16.msra.mxu0 %v857
        %861 = vmatprep.subr.bf16.mxu0 0
        %862 = vmatpush1.bf16.msra.mxu0 0
        %863 = vmatprep.subr.bf16.mxu0 0
        %864 = vmatpush1.bf16.msra.mxu0 0
        %865 = vmatprep.subr.bf16.mxu0 0
        %866 = vmatpush1.bf16.msra.mxu0 0
        %867 = vmatprep.subr.bf16.mxu0 0
        %868 = vmatpush1.bf16.msra.mxu0 0
        %869 = vmatprep.subr.bf16.mxu0 0
        %870 = vmatpush1.bf16.msra.mxu0 0
        %871 = vmatprep.subr.bf16.mxu0 0
        %872 = vmatpush1.bf16.msra.mxu0 0
        %873 = vmatprep.subr.bf16.mxu0 0
        %874 = vmatpush1.bf16.msra.mxu0 0
        %875 = vmatprep.subr.bf16.mxu0 0
        %876 = vmatpush1.bf16.msra.mxu0 0
        %877 = vmatprep.subr.bf16.mxu0 0
        %878 = vmatpush1.bf16.msra.mxu0 0
        %879 = vmatprep.subr.bf16.mxu0 0
        %880 = vmatpush1.bf16.msra.mxu0 0
        %881 = vmatprep.subr.bf16.mxu0 0
        %882 = vmatpush1.bf16.msra.mxu0 0
        %883 = vmatprep.subr.bf16.mxu0 0
        %884 = vmatpush1.bf16.msra.mxu0 0
        %885 = vmatprep.subr.bf16.mxu0 0
        %886 = vmatpush1.bf16.msra.mxu0 0
        %887 = vmatprep.subr.bf16.mxu0 0
        %888 = vmatpush1.bf16.msra.mxu0 0
        %889 = vmatprep.subr.bf16.mxu0 0
        %890 = vmatpush1.bf16.msra.mxu0 0
        %891 = vmatprep.mubr.bf16.mxu0 0
        %892 = vmatmul.mubr.bf16.gmra.mrb[0].mxu0 %v853
        %v893 = vpop.f32.mrb[0].mxu0
        %v894 = vadd.f32 0.0, %v893
        %v895 = vpop.f32.mrb[0].mxu0
        %v896 = vpop.f32.mrb[0].mxu0
        %v897 = vpop.f32.mrb[0].mxu0
        %898 = vdwg.mxu0
        %v899 = vadd.f32 %v850, %v894
        %900 = vst.msk [vmem:[#allocation5] sm:$0xff] %vm773, %v899
        %901 = vst.msk [vmem:[#allocation3] sm:$0xff] %vm842, %v824
        %v902 = vld [vmem:[#allocation2] sm:$0xf]
        %v904 = vunpack.c.l.b16 %v902
        %v905 = vpack.c.b16 %v904, %v904
        %906 = vrot.lane.b32.xlu0 %v905, 120
        %v907 = vpop.permute.xlu0 %906
        %909 = vrot.lane.b32.xlu0 %v704, 120
        %v910 = vpop.permute.xlu0 %909
        %v912 = vsel %vm773, %v907, 0
        %v915 = vsel %vm773, %v910, 0
        %917 = vmatprep.subr.bf16.mxu0 0
        %918 = vmatpush1.bf16.xpose.msra.mxu0 %v915
        %919 = vmatprep.subr.bf16.mxu0 0
        %920 = vmatpush1.bf16.xpose.msra.mxu0 0
        %921 = vmatprep.subr.bf16.mxu0 0
        %922 = vmatpush1.bf16.xpose.msra.mxu0 0
        %923 = vmatprep.subr.bf16.mxu0 0
        %924 = vmatpush1.bf16.xpose.msra.mxu0 0
        %925 = vmatprep.subr.bf16.mxu0 0
        %926 = vmatpush1.bf16.xpose.msra.mxu0 0
        %927 = vmatprep.subr.bf16.mxu0 0
        %928 = vmatpush1.bf16.xpose.msra.mxu0 0
        %929 = vmatprep.subr.bf16.mxu0 0
        %930 = vmatpush1.bf16.xpose.msra.mxu0 0
        %931 = vmatprep.subr.bf16.mxu0 0
        %932 = vmatpush1.bf16.xpose.msra.mxu0 0
        %933 = vmatprep.subr.bf16.mxu0 0
        %934 = vmatpush1.bf16.xpose.msra.mxu0 0
        %935 = vmatprep.subr.bf16.mxu0 0
        %936 = vmatpush1.bf16.xpose.msra.mxu0 0
        %937 = vmatprep.subr.bf16.mxu0 0
        %938 = vmatpush1.bf16.xpose.msra.mxu0 0
        %939 = vmatprep.subr.bf16.mxu0 0
        %940 = vmatpush1.bf16.xpose.msra.mxu0 0
        %941 = vmatprep.subr.bf16.mxu0 0
        %942 = vmatpush1.bf16.xpose.msra.mxu0 0
        %943 = vmatprep.subr.bf16.mxu0 0
        %944 = vmatpush1.bf16.xpose.msra.mxu0 0
        %945 = vmatprep.subr.bf16.mxu0 0
        %946 = vmatpush1.bf16.xpose.msra.mxu0 0
        %947 = vmatprep.subr.bf16.mxu0 0
        %948 = vmatpush1.bf16.xpose.msra.mxu0 0
        %949 = vmatprep.mubr.bf16.mxu0 0
        %950 = vmatmul.mubr.bf16.gmra.mrb[0].mxu0 %v912
        %v951 = vpop.f32.mrb[0].mxu0
        %v952 = vadd.f32 0.0, %v951
        %v953 = vpop.f32.mrb[0].mxu0
        %v954 = vpop.f32.mrb[0].mxu0
        %v955 = vpop.f32.mrb[0].mxu0
        %956 = vdwg.mxu0
        %s957 = scalar_lea.vmem [#allocation3], 8
        %v958 = vld [vmem:[%s957] sm:$0xff]
        %v959 = vsel %vm773, %v952, -inf
        %960 = vmax.xlane.f32.xlu0 %v959
        %v961 = vpop.xlane.xlu0 %960
        %v962 = vmax.f32 %v958, %v961
        %v963 = vsub.f32 %v958, %v962
        %v964 = vmul.f32 %v963, 1.442695
        %v965 = vpow.pop %v964
        %967 = vset.pattern.permute.xlu0 0
        %968 = vperm.xlu0 %967, %v962
        %v969 = vpop.permute.xlu0 %968
        %v971 = vsub.f32 %v952, %v969
        %v972 = vmul.f32 %v971, 1.442695
        %v973 = vpow.pop %v972
        %s974 = scalar_lea.vmem [#allocation4], 8
        %v975 = vld [vmem:[%s974] sm:$0xff]
        %v976 = vmul.f32 %v965, %v975
        %v977 = vsel %vm773, %v973, 0.0
        %978 = vadd.xlane.f32.xlu0 %v977
        %v979 = vpop.xlane.xlu0 %978
        %v980 = vadd.f32 %v976, %v979
        %981 = vst.msk [vmem:[%s974] sm:$0xff] %vm842, %v980
        %v982 = vld [vmem:[#allocation5] sm:$0xff]
        %984 = vset.pattern.permute.xlu0 0
        %985 = vperm.xlu0 %984, %v965
        %v986 = vpop.permute.xlu0 %985
        %v988 = vmul.f32 %v986, %v982
        %v989 = vpack.c.bf16 %v973, %v973
        %991 = vrot.lane.b32.xlu0 %v771, 120
        %v992 = vpop.permute.xlu0 %991
        %v994 = vsel %vm773, %v989, 0
        %v997 = vsel %vm855, %v992, 0
        %999 = vmatprep.subr.bf16.mxu0 0
        %1000 = vmatpush1.bf16.msra.mxu0 %v997
        %1001 = vmatprep.subr.bf16.mxu0 0
        %1002 = vmatpush1.bf16.msra.mxu0 0
        %1003 = vmatprep.subr.bf16.mxu0 0
        %1004 = vmatpush1.bf16.msra.mxu0 0
        %1005 = vmatprep.subr.bf16.mxu0 0
        %1006 = vmatpush1.bf16.msra.mxu0 0
        %1007 = vmatprep.subr.bf16.mxu0 0
        %1008 = vmatpush1.bf16.msra.mxu0 0
        %1009 = vmatprep.subr.bf16.mxu0 0
        %1010 = vmatpush1.bf16.msra.mxu0 0
        %1011 = vmatprep.subr.bf16.mxu0 0
        %1012 = vmatpush1.bf16.msra.mxu0 0
        %1013 = vmatprep.subr.bf16.mxu0 0
        %1014 = vmatpush1.bf16.msra.mxu0 0
        %1015 = vmatprep.subr.bf16.mxu0 0
        %1016 = vmatpush1.bf16.msra.mxu0 0
        %1017 = vmatprep.subr.bf16.mxu0 0
        %1018 = vmatpush1.bf16.msra.mxu0 0
        %1019 = vmatprep.subr.bf16.mxu0 0
        %1020 = vmatpush1.bf16.msra.mxu0 0
        %1021 = vmatprep.subr.bf16.mxu0 0
        %1022 = vmatpush1.bf16.msra.mxu0 0
        %1023 = vmatprep.subr.bf16.mxu0 0
        %1024 = vmatpush1.bf16.msra.mxu0 0
        %1025 = vmatprep.subr.bf16.mxu0 0
        %1026 = vmatpush1.bf16.msra.mxu0 0
        %1027 = vmatprep.subr.bf16.mxu0 0
        %1028 = vmatpush1.bf16.msra.mxu0 0
        %1029 = vmatprep.subr.bf16.mxu0 0
        %1030 = vmatpush1.bf16.msra.mxu0 0
        %1031 = vmatprep.mubr.bf16.mxu0 0
        %1032 = vmatmul.mubr.bf16.gmra.mrb[0].mxu0 %v994
        %v1033 = vpop.f32.mrb[0].mxu0
        %v1034 = vadd.f32 0.0, %v1033
        %v1035 = vpop.f32.mrb[0].mxu0
        %v1036 = vpop.f32.mrb[0].mxu0
        %v1037 = vpop.f32.mrb[0].mxu0
        %1038 = vdwg.mxu0
        %1040 = vrot.lane.b32.xlu0 %v1034, 8
        %v1041 = vpop.permute.xlu0 %1040
        %v1043 = vadd.f32 %v988, %v1041
        %vm1044 = vcmask 130112
        %1045 = vst.msk [vmem:[#allocation5] sm:$0xff] %vm1044, %v1043
        %1046 = vst.msk [vmem:[%s957] sm:$0xff] %vm842, %v962
        %v1047 = vld [vmem:[#allocation2] sm:$0xf]
        %v1049 = vunpack.c.l.b16 %v1047
        %v1050 = vpack.c.b16 %v1049, %v1049
        %1051 = vrot.lane.b32.xlu0 %v1050, 112
        %v1052 = vpop.permute.xlu0 %1051
        %1053 = vrot.lane.b32.xlu0 %v704, 112
        %v1054 = vpop.permute.xlu0 %1053
        %v1056 = vsel %vm773, %v1052, 0
        %v1059 = vsel %vm773, %v1054, 0
        %1061 = vmatprep.subr.bf16.mxu0 0
        %1062 = vmatpush1.bf16.xpose.msra.mxu0 %v1059
        %1063 = vmatprep.subr.bf16.mxu0 0
        %1064 = vmatpush1.bf16.xpose.msra.mxu0 0
        %1065 = vmatprep.subr.bf16.mxu0 0
        %1066 = vmatpush1.bf16.xpose.msra.mxu0 0
        %1067 = vmatprep.subr.bf16.mxu0 0
        %1068 = vmatpush1.bf16.xpose.msra.mxu0 0
        %1069 = vmatprep.subr.bf16.mxu0 0
        %1070 = vmatpush1.bf16.xpose.msra.mxu0 0
        %1071 = vmatprep.subr.bf16.mxu0 0
        %1072 = vmatpush1.bf16.xpose.msra.mxu0 0
        %1073 = vmatprep.subr.bf16.mxu0 0
        %1074 = vmatpush1.bf16.xpose.msra.mxu0 0
        %1075 = vmatprep.subr.bf16.mxu0 0
        %1076 = vmatpush1.bf16.xpose.msra.mxu0 0
        %1077 = vmatprep.subr.bf16.mxu0 0
        %1078 = vmatpush1.bf16.xpose.msra.mxu0 0
        %1079 = vmatprep.subr.bf16.mxu0 0
        %1080 = vmatpush1.bf16.xpose.msra.mxu0 0
        %1081 = vmatprep.subr.bf16.mxu0 0
        %1082 = vmatpush1.bf16.xpose.msra.mxu0 0
        %1083 = vmatprep.subr.bf16.mxu0 0
        %1084 = vmatpush1.bf16.xpose.msra.mxu0 0
        %1085 = vmatprep.subr.bf16.mxu0 0
        %1086 = vmatpush1.bf16.xpose.msra.mxu0 0
        %1087 = vmatprep.subr.bf16.mxu0 0
        %1088 = vmatpush1.bf16.xpose.msra.mxu0 0
        %1089 = vmatprep.subr.bf16.mxu0 0
        %1090 = vmatpush1.bf16.xpose.msra.mxu0 0
        %1091 = vmatprep.subr.bf16.mxu0 0
        %1092 = vmatpush1.bf16.xpose.msra.mxu0 0
        %1093 = vmatprep.mubr.bf16.mxu0 0
        %1094 = vmatmul.mubr.bf16.gmra.mrb[0].mxu0 %v1056
        %v1095 = vpop.f32.mrb[0].mxu0
        %v1096 = vadd.f32 0.0, %v1095
        %v1097 = vpop.f32.mrb[0].mxu0
        %v1098 = vpop.f32.mrb[0].mxu0
        %v1099 = vpop.f32.mrb[0].mxu0
        %1100 = vdwg.mxu0
        %s1101 = scalar_lea.vmem [#allocation3], 16
        %v1102 = vld [vmem:[%s1101] sm:$0xff]
        %v1103 = vsel %vm773, %v1096, -inf
        %1104 = vmax.xlane.f32.xlu0 %v1103
        %v1105 = vpop.xlane.xlu0 %1104
        %v1106 = vmax.f32 %v1102, %v1105
        %v1107 = vsub.f32 %v1102, %v1106
        %v1108 = vmul.f32 %v1107, 1.442695
        %v1109 = vpow.pop %v1108
        %1111 = vset.pattern.permute.xlu0 0
        %1112 = vperm.xlu0 %1111, %v1106
        %v1113 = vpop.permute.xlu0 %1112
        %v1115 = vsub.f32 %v1096, %v1113
        %v1116 = vmul.f32 %v1115, 1.442695
        %v1117 = vpow.pop %v1116
        %s1118 = scalar_lea.vmem [#allocation4], 16
        %v1119 = vld [vmem:[%s1118] sm:$0xff]
        %v1120 = vmul.f32 %v1109, %v1119
        %v1121 = vsel %vm773, %v1117, 0.0
        %1122 = vadd.xlane.f32.xlu0 %v1121
        %v1123 = vpop.xlane.xlu0 %1122
        %v1124 = vadd.f32 %v1120, %v1123
        %1125 = vst.msk [vmem:[%s1118] sm:$0xff] %vm842, %v1124
        %v1126 = vld [vmem:[#allocation5] sm:$0xff]
        %1128 = vset.pattern.permute.xlu0 0
        %1129 = vperm.xlu0 %1128, %v1109
        %v1130 = vpop.permute.xlu0 %1129
        %v1132 = vmul.f32 %v1130, %v1126
        %v1133 = vpack.c.bf16 %v1117, %v1117
        %1134 = vrot.lane.b32.xlu0 %v771, 112
        %v1135 = vpop.permute.xlu0 %1134
        %v1137 = vsel %vm773, %v1133, 0
        %v1140 = vsel %vm855, %v1135, 0
        %1142 = vmatprep.subr.bf16.mxu0 0
        %1143 = vmatpush1.bf16.msra.mxu0 %v1140
        %1144 = vmatprep.subr.bf16.mxu0 0
        %1145 = vmatpush1.bf16.msra.mxu0 0
        %1146 = vmatprep.subr.bf16.mxu0 0
        %1147 = vmatpush1.bf16.msra.mxu0 0
        %1148 = vmatprep.subr.bf16.mxu0 0
        %1149 = vmatpush1.bf16.msra.mxu0 0
        %1150 = vmatprep.subr.bf16.mxu0 0
        %1151 = vmatpush1.bf16.msra.mxu0 0
        %1152 = vmatprep.subr.bf16.mxu0 0
        %1153 = vmatpush1.bf16.msra.mxu0 0
        %1154 = vmatprep.subr.bf16.mxu0 0
        %1155 = vmatpush1.bf16.msra.mxu0 0
        %1156 = vmatprep.subr.bf16.mxu0 0
        %1157 = vmatpush1.bf16.msra.mxu0 0
        %1158 = vmatprep.subr.bf16.mxu0 0
        %1159 = vmatpush1.bf16.msra.mxu0 0
        %1160 = vmatprep.subr.bf16.mxu0 0
        %1161 = vmatpush1.bf16.msra.mxu0 0
        %1162 = vmatprep.subr.bf16.mxu0 0
        %1163 = vmatpush1.bf16.msra.mxu0 0
        %1164 = vmatprep.subr.bf16.mxu0 0
        %1165 = vmatpush1.bf16.msra.mxu0 0
        %1166 = vmatprep.subr.bf16.mxu0 0
        %1167 = vmatpush1.bf16.msra.mxu0 0
        %1168 = vmatprep.subr.bf16.mxu0 0
        %1169 = vmatpush1.bf16.msra.mxu0 0
        %1170 = vmatprep.subr.bf16.mxu0 0
        %1171 = vmatpush1.bf16.msra.mxu0 0
        %1172 = vmatprep.subr.bf16.mxu0 0
        %1173 = vmatpush1.bf16.msra.mxu0 0
        %1174 = vmatprep.mubr.bf16.mxu0 0
        %1175 = vmatmul.mubr.bf16.gmra.mrb[0].mxu0 %v1137
        %v1176 = vpop.f32.mrb[0].mxu0
        %v1177 = vadd.f32 0.0, %v1176
        %v1178 = vpop.f32.mrb[0].mxu0
        %v1179 = vpop.f32.mrb[0].mxu0
        %v1180 = vpop.f32.mrb[0].mxu0
        %1181 = vdwg.mxu0
        %1183 = vrot.lane.b32.xlu0 %v1177, 16
        %v1184 = vpop.permute.xlu0 %1183
        %v1186 = vadd.f32 %v1132, %v1184
        %vm1187 = vcmask 195712
        %1188 = vst.msk [vmem:[#allocation5] sm:$0xff] %vm1187, %v1186
        %1189 = vst.msk [vmem:[%s1101] sm:$0xff] %vm842, %v1106
        %v1190 = vld [vmem:[#allocation2] sm:$0xf]
        %v1192 = vunpack.c.l.b16 %v1190
        %v1193 = vpack.c.b16 %v1192, %v1192
        %1194 = vrot.lane.b32.xlu0 %v1193, 104
        %v1195 = vpop.permute.xlu0 %1194
        %1196 = vrot.lane.b32.xlu0 %v704, 104
        %v1197 = vpop.permute.xlu0 %1196
        %v1199 = vsel %vm773, %v1195, 0
        %v1202 = vsel %vm773, %v1197, 0
        %1204 = vmatprep.subr.bf16.mxu0 0
        %1205 = vmatpush1.bf16.xpose.msra.mxu0 %v1202
        %1206 = vmatprep.subr.bf16.mxu0 0
        %1207 = vmatpush1.bf16.xpose.msra.mxu0 0
        %1208 = vmatprep.subr.bf16.mxu0 0
        %1209 = vmatpush1.bf16.xpose.msra.mxu0 0
        %1210 = vmatprep.subr.bf16.mxu0 0
        %1211 = vmatpush1.bf16.xpose.msra.mxu0 0
        %1212 = vmatprep.subr.bf16.mxu0 0
        %1213 = vmatpush1.bf16.xpose.msra.mxu0 0
        %1214 = vmatprep.subr.bf16.mxu0 0
        %1215 = vmatpush1.bf16.xpose.msra.mxu0 0
        %1216 = vmatprep.subr.bf16.mxu0 0
        %1217 = vmatpush1.bf16.xpose.msra.mxu0 0
        %1218 = vmatprep.subr.bf16.mxu0 0
        %1219 = vmatpush1.bf16.xpose.msra.mxu0 0
        %1220 = vmatprep.subr.bf16.mxu0 0
        %1221 = vmatpush1.bf16.xpose.msra.mxu0 0
        %1222 = vmatprep.subr.bf16.mxu0 0
        %1223 = vmatpush1.bf16.xpose.msra.mxu0 0
        %1224 = vmatprep.subr.bf16.mxu0 0
        %1225 = vmatpush1.bf16.xpose.msra.mxu0 0
        %1226 = vmatprep.subr.bf16.mxu0 0
        %1227 = vmatpush1.bf16.xpose.msra.mxu0 0
        %1228 = vmatprep.subr.bf16.mxu0 0
        %1229 = vmatpush1.bf16.xpose.msra.mxu0 0
        %1230 = vmatprep.subr.bf16.mxu0 0
        %1231 = vmatpush1.bf16.xpose.msra.mxu0 0
        %1232 = vmatprep.subr.bf16.mxu0 0
        %1233 = vmatpush1.bf16.xpose.msra.mxu0 0
        %1234 = vmatprep.subr.bf16.mxu0 0
        %1235 = vmatpush1.bf16.xpose.msra.mxu0 0
        %1236 = vmatprep.mubr.bf16.mxu0 0
        %1237 = vmatmul.mubr.bf16.gmra.mrb[0].mxu0 %v1199
        %v1238 = vpop.f32.mrb[0].mxu0
        %v1239 = vadd.f32 0.0, %v1238
        %v1240 = vpop.f32.mrb[0].mxu0
        %v1241 = vpop.f32.mrb[0].mxu0
        %v1242 = vpop.f32.mrb[0].mxu0
        %1243 = vdwg.mxu0
        %s1244 = scalar_lea.vmem [#allocation3], 24
        %v1245 = vld [vmem:[%s1244] sm:$0xff]
        %v1246 = vsel %vm773, %v1239, -inf
        %1247 = vmax.xlane.f32.xlu0 %v1246
        %v1248 = vpop.xlane.xlu0 %1247
        %v1249 = vmax.f32 %v1245, %v1248
        %v1250 = vsub.f32 %v1245, %v1249
        %v1251 = vmul.f32 %v1250, 1.442695
        %v1252 = vpow.pop %v1251
        %1254 = vset.pattern.permute.xlu0 0
        %1255 = vperm.xlu0 %1254, %v1249
        %v1256 = vpop.permute.xlu0 %1255
        %v1258 = vsub.f32 %v1239, %v1256
        %v1259 = vmul.f32 %v1258, 1.442695
        %v1260 = vpow.pop %v1259
        %s1261 = scalar_lea.vmem [#allocation4], 24
        %v1262 = vld [vmem:[%s1261] sm:$0xff]
        %v1263 = vmul.f32 %v1252, %v1262
        %v1264 = vsel %vm773, %v1260, 0.0
        %1265 = vadd.xlane.f32.xlu0 %v1264
        %v1266 = vpop.xlane.xlu0 %1265
        %v1267 = vadd.f32 %v1263, %v1266
        %1268 = vst.msk [vmem:[%s1261] sm:$0xff] %vm842, %v1267
        %v1269 = vld [vmem:[#allocation5] sm:$0xff]
        %1271 = vset.pattern.permute.xlu0 0
        %1272 = vperm.xlu0 %1271, %v1252
        %v1273 = vpop.permute.xlu0 %1272
        %v1275 = vmul.f32 %v1273, %v1269
        %v1276 = vpack.c.bf16 %v1260, %v1260
        %1277 = vrot.lane.b32.xlu0 %v771, 104
        %v1278 = vpop.permute.xlu0 %1277
        %v1280 = vsel %vm773, %v1276, 0
        %v1283 = vsel %vm855, %v1278, 0
        %1285 = vmatprep.subr.bf16.mxu0 0
        %1286 = vmatpush1.bf16.msra.mxu0 %v1283
        %1287 = vmatprep.subr.bf16.mxu0 0
        %1288 = vmatpush1.bf16.msra.mxu0 0
        %1289 = vmatprep.subr.bf16.mxu0 0
        %1290 = vmatpush1.bf16.msra.mxu0 0
        %1291 = vmatprep.subr.bf16.mxu0 0
        %1292 = vmatpush1.bf16.msra.mxu0 0
        %1293 = vmatprep.subr.bf16.mxu0 0
        %1294 = vmatpush1.bf16.msra.mxu0 0
        %1295 = vmatprep.subr.bf16.mxu0 0
        %1296 = vmatpush1.bf16.msra.mxu0 0
        %1297 = vmatprep.subr.bf16.mxu0 0
        %1298 = vmatpush1.bf16.msra.mxu0 0
        %1299 = vmatprep.subr.bf16.mxu0 0
        %1300 = vmatpush1.bf16.msra.mxu0 0
        %1301 = vmatprep.subr.bf16.mxu0 0
        %1302 = vmatpush1.bf16.msra.mxu0 0
        %1303 = vmatprep.subr.bf16.mxu0 0
        %1304 = vmatpush1.bf16.msra.mxu0 0
        %1305 = vmatprep.subr.bf16.mxu0 0
        %1306 = vmatpush1.bf16.msra.mxu0 0
        %1307 = vmatprep.subr.bf16.mxu0 0
        %1308 = vmatpush1.bf16.msra.mxu0 0
        %1309 = vmatprep.subr.bf16.mxu0 0
        %1310 = vmatpush1.bf16.msra.mxu0 0
        %1311 = vmatprep.subr.bf16.mxu0 0
        %1312 = vmatpush1.bf16.msra.mxu0 0
        %1313 = vmatprep.subr.bf16.mxu0 0
        %1314 = vmatpush1.bf16.msra.mxu0 0
        %1315 = vmatprep.subr.bf16.mxu0 0
        %1316 = vmatpush1.bf16.msra.mxu0 0
        %1317 = vmatprep.mubr.bf16.mxu0 0
        %1318 = vmatmul.mubr.bf16.gmra.mrb[0].mxu0 %v1280
        %v1319 = vpop.f32.mrb[0].mxu0
        %v1320 = vadd.f32 0.0, %v1319
        %v1321 = vpop.f32.mrb[0].mxu0
        %v1322 = vpop.f32.mrb[0].mxu0
        %v1323 = vpop.f32.mrb[0].mxu0
        %1324 = vdwg.mxu0
        %1326 = vrot.lane.b32.xlu0 %v1320, 24
        %v1327 = vpop.permute.xlu0 %1326
        %v1329 = vadd.f32 %v1275, %v1327
        %vm1330 = vcmask 261312
        %1331 = vst.msk [vmem:[#allocation5] sm:$0xff] %vm1330, %v1329
        %1332 = vst.msk [vmem:[%s1244] sm:$0xff] %vm842, %v1249
        // Predicated region
        $region93: #{tpu_custom_call.1} parent=63 // pred_check
          %p1333 = pneg %p546
        $region94: #{tpu_custom_call.1} parent=63 // pred_check_branch
          %1335 = sbr.rel (%p1333) target = $region96
        $region95: #{tpu_custom_call.1} parent=63 // pred_region
          %v1336 = vld [vmem:[#allocation4] sm:$0xff]
          %v1337 = vrcp.pop %v1336
          %v1338 = vld [vmem:[#allocation5] sm:$0xff]
          %1340 = vset.pattern.permute.xlu0 0
          %1341 = vperm.xlu0 %1340, %v1337
          %v1342 = vpop.permute.xlu0 %1341
          %v1344 = vmul.f32 %v1338, %v1342
          %1345 = vst.msk [vmem:[#allocation5] sm:$0xff] %vm773, %v1344
          %v1346 = vld [vmem:[%s974] sm:$0xff]
          %v1347 = vrcp.pop %v1346
          %v1348 = vld [vmem:[#allocation5] sm:$0xff]
          %1350 = vset.pattern.permute.xlu0 0
          %1351 = vperm.xlu0 %1350, %v1347
          %v1352 = vpop.permute.xlu0 %1351
          %v1354 = vmul.f32 %v1348, %v1352
          %1355 = vst.msk [vmem:[#allocation5] sm:$0xff] %vm1044, %v1354
          %v1356 = vld [vmem:[%s1118] sm:$0xff]
          %v1357 = vrcp.pop %v1356
          %v1358 = vld [vmem:[#allocation5] sm:$0xff]
          %1360 = vset.pattern.permute.xlu0 0
          %1361 = vperm.xlu0 %1360, %v1357
          %v1362 = vpop.permute.xlu0 %1361
          %v1364 = vmul.f32 %v1358, %v1362
          %1365 = vst.msk [vmem:[#allocation5] sm:$0xff] %vm1187, %v1364
          %v1366 = vld [vmem:[%s1261] sm:$0xff]
          %v1367 = vrcp.pop %v1366
          %v1368 = vld [vmem:[#allocation5] sm:$0xff]
          %1370 = vset.pattern.permute.xlu0 0
          %1371 = vperm.xlu0 %1370, %v1367
          %v1372 = vpop.permute.xlu0 %1371
          %v1374 = vmul.f32 %v1368, %v1372
          %1375 = vst.msk [vmem:[#allocation5] sm:$0xff] %vm1330, %v1374
          %v1376 = vld [vmem:[#allocation5] sm:$0xff]
          %v1377 = vpack.c.bf16 %v1376, %v1376
          %v1378 = vld [vmem:[%s9] sm:$0xf]
          %v1379 = vld [vmem:[%s9 + $0x4] sm:$0xf]
          %v1380 = vld [vmem:[%s9 + $0x8] sm:$0xf]
          %v1381 = vld [vmem:[%s9 + $0xc] sm:$0xf]
          %v1382 = vld [vmem:[%s10] sm:$0x1]
          %v1384 = vlaneseq
          %v1385 = vshrl.u32 %v1384, 7
          %v1386 = vsub.s32 0, %v1385
          %v1387 = vrot.slane %v1382, %v1386
          %v1393 = vunpack.c.l.b16 %v1378
          %v1394 = vunpack.c.l.b16 %v1379
          %v1395 = vunpack.c.l.b16 %v1380
          %v1396 = vunpack.c.l.b16 %v1381
          %v1397 = vpack.c.b16 %v1394, %v1393
          %v1398 = vpack.c.b16 %v1396, %v1395
          %v1402 = vsel %vm660, %v1377, 0
          %1404 = vmatprep.subr.bf16.mxu0 0
          %1405 = vmatpush1.bf16.msra.mxu0 %v1397
          %1406 = vmatprep.subr.bf16.mxu0 0
          %1407 = vmatpush1.bf16.msra.mxu0 %v1398
          %1408 = vmatprep.subr.bf16.mxu0 0
          %1409 = vmatpush1.bf16.msra.mxu0 0
          %1410 = vmatprep.subr.bf16.mxu0 0
          %1411 = vmatpush1.bf16.msra.mxu0 0
          %1412 = vmatprep.subr.bf16.mxu0 0
          %1413 = vmatpush1.bf16.msra.mxu0 0
          %1414 = vmatprep.subr.bf16.mxu0 0
          %1415 = vmatpush1.bf16.msra.mxu0 0
          %1416 = vmatprep.subr.bf16.mxu0 0
          %1417 = vmatpush1.bf16.msra.mxu0 0
          %1418 = vmatprep.subr.bf16.mxu0 0
          %1419 = vmatpush1.bf16.msra.mxu0 0
          %1420 = vmatprep.subr.bf16.mxu0 0
          %1421 = vmatpush1.bf16.msra.mxu0 0
          %1422 = vmatprep.subr.bf16.mxu0 0
          %1423 = vmatpush1.bf16.msra.mxu0 0
          %1424 = vmatprep.subr.bf16.mxu0 0
          %1425 = vmatpush1.bf16.msra.mxu0 0
          %1426 = vmatprep.subr.bf16.mxu0 0
          %1427 = vmatpush1.bf16.msra.mxu0 0
          %1428 = vmatprep.subr.bf16.mxu0 0
          %1429 = vmatpush1.bf16.msra.mxu0 0
          %1430 = vmatprep.subr.bf16.mxu0 0
          %1431 = vmatpush1.bf16.msra.mxu0 0
          %1432 = vmatprep.subr.bf16.mxu0 0
          %1433 = vmatpush1.bf16.msra.mxu0 0
          %1434 = vmatprep.subr.bf16.mxu0 0
          %1435 = vmatpush1.bf16.msra.mxu0 0
          %1436 = vmatprep.mubr.bf16.mxu0 0
          %1437 = vmatmul.mubr.bf16.gmra.mrb[0].mxu0 %v1402
          %v1438 = vpop.f32.mrb[0].mxu0
          %v1439 = vadd.f32 %v1387, %v1438
          %v1440 = vpop.f32.mrb[0].mxu0
          %v1441 = vpop.f32.mrb[0].mxu0
          %v1442 = vpop.f32.mrb[0].mxu0
          %1443 = vdwg.mxu0
          %1444 = vst.msk [vmem:[%s544] sm:$0xff] %vm660, %v1439
        $region96: #{tpu_custom_call.1} parent=63 // pred_fallthru
          _
        %s1445 = sand.u32 %s314, 1
        %s1446 = scalar_lea.sflag [#allocation8], %s1445
        %s1447 = sand.u32 %s314, 1
        %s1448 = smul.addr %s1447, 8
        %s1449 = scalar_lea.vmem [#allocation17], %s1448
        // Predicated region
        $region97: #{tpu_custom_call.1} parent=63 // pred_check
          %p1450 = pneg %p324
        $region98: #{tpu_custom_call.1} parent=63 // pred_check_branch
          %1452 = sbr.rel (%p1450) target = $region100
        $region99: #{tpu_custom_call.1} parent=63 // pred_region
          %s1454 = ssub.s32 128, 128
          %1455 = vsyncadd %s1446, %s1454
          %s1456 = sadd.s32 %s39, %s38
          %s1457 = smul.addr %s1456, 128
          %s1458 = scalar_lea.hbm %s11, %s1457
          %s1460 = sshll.u32 %s1449, 4
          %s1461 = int_to_ptr.vmem [resolvable:$true] %s1460
          %1463 = dma.vmem_to_hbm [thread:$0]  %s1461, 128, %s1458, %s1446
        $region100: #{tpu_custom_call.1} parent=63 // pred_fallthru
          _
      $region64: #{tpu_custom_call.1} parent=5 // pred_fallthru
        _
      %p1464 = scmp.le.s32.totalorder 2, %s28
      // Predicated region
      $region101: #{tpu_custom_call.1} parent=5 // pred_check
        %p1465 = pneg %p1464
      $region102: #{tpu_custom_call.1} parent=5 // pred_check_branch
        %1467 = sbr.rel (%p1465) target = $region104
      $region103: #{tpu_custom_call.1} parent=5 // pred_region
        %s1468 = ssub.s32 %s28, 2
        // Predicated region
        $region105: #{tpu_custom_call.1} parent=103 // pred_check
          %p1469 = pneg %p330
        $region106: #{tpu_custom_call.1} parent=103 // pred_check_branch
          %1471 = sbr.rel (%p1469) target = $region108
        $region107: #{tpu_custom_call.1} parent=103 // pred_region
          %s1472 = sand.u32 %s315, 1
          %s1473 = scalar_lea.sflag [#allocation8], %s1472
          %s1474 = sand.u32 %s315, 1
          %s1475 = smul.addr %s1474, 8
          %s1476 = scalar_lea.vmem [#allocation17], %s1475
          %1477 = dma.done %s1473, 128
        $region108: #{tpu_custom_call.1} parent=103 // pred_fallthru
          _
      $region104: #{tpu_custom_call.1} parent=5 // pred_fallthru
        _
    $region6: #{tpu_custom_call.1} parent=1 // loop_footer
      %s32 = sadd.s32 1, %s28
    $region7: #{tpu_custom_call.1} parent=1 // loop_footer_branch
      %27 = sbr.rel target = $region3
    $region8: #{tpu_custom_call.1} parent=1 // loop_exit
      _
    %1478 = vsyncpa [#allocation7], 1
    %s1479 = scalar_lea.sflag [#allocation7], 1
    %1480 = vsyncpa %s1479, 1
    %1481 = vsyncpa [#allocation10], 1
    %s1482 = scalar_lea.sflag [#allocation10], 1
    %1483 = vsyncpa %s1482, 1
    %1484 = vsyncpa [#allocation13], 1
    %1485 = vsyncpa [#allocation16], 1
    %1486 = vsyncpa [#allocation8], 1
    %s1487 = scalar_lea.sflag [#allocation8], 1
    %1488 = vsyncpa %s1487, 1

</llo_original>
